<compile_context>
chip_gen: v6e
topology: v6e:2x2x1
jax: 0.10.0
libtpu: 0.0.40
codegen_flags: <defaults>
</compile_context>

<pallas_src>
import math
import numpy as np
import jax
import jax.numpy as jnp
from jax.experimental import pallas as pl
from jax.experimental.pallas import tpu as pltpu

# ----------------------------- model constants -----------------------------
L = 16                # hash-grid levels
F_PER_LEVEL = 2       # features per level
N_MIN = 16            # base resolution
ENC_DIM = L * F_PER_LEVEL            # 32
GEO_HIDDEN = 64
GEO_OUT = 17                          # 1 sigma + 16 geometry features
SH_DIM = 16                           # SphericalHarmonics degree 4
RGB_IN = SH_DIM + (GEO_OUT - 1)       # 32
RGB_HIDDEN = 64
SLAB_DIM = ENC_DIM + SH_DIM           # 48 = grid feat (32) + SH (16)
OUT_DIM = 4                           # [sigma | rgb]
TN_MAX = 2048                         # rows per grid step (amortizes step overhead)


def _round_up(x, m):
    return (x + m - 1) // m * m


# ----------------------------- SH basis (degree 4) --------------------------
def _sh4_terms(x, y, z):
    """x, y, z: (..., 1) columns of a unit direction. Returns list of 16 terms."""
    xy, xz, yz = x * y, x * z, y * z
    x2, y2, z2 = x * x, y * y, z * z
    return [
        jnp.full_like(x, 0.28209479177387814),
        -0.48860251190291987 * y,
        0.48860251190291987 * z,
        -0.48860251190291987 * x,
        1.0925484305920792 * xy,
        -1.0925484305920792 * yz,
        0.94617469575755997 * z2 - 0.31539156525252005,
        -1.0925484305920792 * xz,
        0.54627421529603959 * (x2 - y2),
        0.59004358992664352 * y * (-3.0 * x2 + y2),
        2.8906114426405538 * xy * z,
        0.45704579946446572 * y * (1.0 - 5.0 * z2),
        0.3731763325901154 * z * (5.0 * z2 - 3.0),
        0.45704579946446572 * x * (1.0 - 5.0 * z2),
        1.4453057213202769 * z * (x2 - y2),
        0.59004358992664352 * x * (-x2 + 3.0 * y2),
    ]


def sh_encode(d):
    """d: (N, 3) raw directions -> (N, 16) degree-4 SH of the normalized direction."""
    inv_norm = jax.lax.rsqrt(jnp.sum(d * d, axis=-1, keepdims=True))
    dn = d * inv_norm
    return jnp.concatenate(_sh4_terms(dn[:, 0:1], dn[:, 1:2], dn[:, 2:3]), axis=-1)


# ----------------------------- Pallas kernel --------------------------------
def _ngp_mlp_kernel(slab_ref, wg1_ref, wg2_ref, wr1s_ref, wr1g_ref,
                    wr2_ref, wr3_ref, out_ref):
    slab = slab_ref[...]                                   # (TN, 48) f32
    feat = slab[:, :ENC_DIM].astype(jnp.bfloat16)          # (TN, 32)
    sh = slab[:, ENC_DIM:SLAB_DIM].astype(jnp.bfloat16)    # (TN, 16)

    # geo_net: Linear(32,64) + ReLU, Linear(64,17) (no output activation)
    h1 = jnp.maximum(
        jnp.dot(feat, wg1_ref[...], preferred_element_type=jnp.float32), 0.0)
    h = jnp.dot(h1.astype(jnp.bfloat16), wg2_ref[...],
                preferred_element_type=jnp.float32)        # (TN, 17)
    sigma = jnp.exp(h[:, 0:1])                             # TruncExp forward = exp
    geo = h[:, 1:GEO_OUT].astype(jnp.bfloat16)             # (TN, 16)

    # rgb_net: Linear(32,64)+ReLU, Linear(64,64)+ReLU, Linear(64,3)+Sigmoid.
    # Input is concat([sh, geo]); implemented as split-K MXU matmuls.
    r1 = (jnp.dot(sh, wr1s_ref[...], preferred_element_type=jnp.float32)
          + jnp.dot(geo, wr1g_ref[...], preferred_element_type=jnp.float32))
    r1 = jnp.maximum(r1, 0.0).astype(jnp.bfloat16)
    r2 = jnp.maximum(
        jnp.dot(r1, wr2_ref[...], preferred_element_type=jnp.float32), 0.0)
    rgb = jax.nn.sigmoid(
        jnp.dot(r2.astype(jnp.bfloat16), wr3_ref[...],
                preferred_element_type=jnp.float32))       # (TN, 3)

    # Merged (TN, 4) output block: col 0 = sigma, cols 1:4 = rgb.
    out_ref[:, 0:1] = sigma
    out_ref[:, 1:OUT_DIM] = rgb


def _mlp_pallas(feat, sh, wg1, wg2, wr1, wr2, wr3):
    """feat: (N,32) f32, sh: (N,16) f32. Returns sigma (N,), rgb (N,3)."""
    n = feat.shape[0]
    tn = min(TN_MAX, _round_up(n, 8))
    n_pad = _round_up(n, tn)

    slab = jnp.concatenate([feat, sh], axis=-1)            # (N, 48) f32
    if n_pad != n:
        slab = jnp.pad(slab, ((0, n_pad - n), (0, 0)))

    wb = lambda w: w.astype(jnp.bfloat16)
    out = pl.pallas_call(
        _ngp_mlp_kernel,
        out_shape=jax.ShapeDtypeStruct((n_pad, OUT_DIM), jnp.float32),
        grid_spec=pltpu.PrefetchScalarGridSpec(
            num_scalar_prefetch=0,
            grid=(n_pad // tn,),
            in_specs=[
                pl.BlockSpec((tn, SLAB_DIM), lambda i: (i, 0)),
                pl.BlockSpec((ENC_DIM, GEO_HIDDEN), lambda i: (0, 0)),
                pl.BlockSpec((GEO_HIDDEN, GEO_OUT), lambda i: (0, 0)),
                pl.BlockSpec((SH_DIM, RGB_HIDDEN), lambda i: (0, 0)),
                pl.BlockSpec((GEO_OUT - 1, RGB_HIDDEN), lambda i: (0, 0)),
                pl.BlockSpec((RGB_HIDDEN, RGB_HIDDEN), lambda i: (0, 0)),
                pl.BlockSpec((RGB_HIDDEN, 3), lambda i: (0, 0)),
            ],
            out_specs=pl.BlockSpec((tn, OUT_DIM), lambda i: (i, 0)),
        ),
        compiler_params=pltpu.CompilerParams(
            dimension_semantics=("parallel",)),
    )(slab, wb(wg1), wb(wg2), wb(wr1[:SH_DIM]), wb(wr1[SH_DIM:]), wb(wr2), wb(wr3))

    return out[:n, 0], out[:n, 1:OUT_DIM]


# --------------------- hash-grid encoding (plain JAX glue) -------------------
def hash_grid_encode(xn, tables, level_scales, T):
    """xn: (N,3) in [0,1]. tables: (L, T, F). Returns (N, L*F)."""
    # TODO(synk): data-dependent HBM gather; kept in XLA rather than Pallas.
    n = xn.shape[0]
    feats = []
    for l, s in enumerate(level_scales):
        res = int(np.ceil(s)) + 1
        pos = xn * s + 0.5
        pos_grid = jnp.floor(pos)
        frac = pos - pos_grid
        pos_grid = pos_grid.astype(jnp.uint32)
        acc = jnp.zeros((n, F_PER_LEVEL), jnp.float32)
        for corner in range(8):
            offs = np.array([(corner >> k) & 1 for k in range(3)], dtype=np.uint32)
            pg = pos_grid + jnp.asarray(offs)
            w = jnp.prod(jnp.where(jnp.asarray(offs) == 1, frac, 1.0 - frac),
                         axis=-1, keepdims=True)
            if res ** 3 <= T:   # dense level: linear index
                idx = pg[:, 0] + pg[:, 1] * res + pg[:, 2] * res * res
            else:               # hashed level: tcnn spatial hash
                idx = (pg[:, 0]
                       ^ (pg[:, 1] * jnp.uint32(2654435761))
                       ^ (pg[:, 2] * jnp.uint32(805459861)))
            idx = (idx & jnp.uint32(T - 1)).astype(jnp.int32)
            acc = acc + w * tables[l, idx]
        feats.append(acc)
    return jnp.concatenate(feats, axis=-1)


# ----------------------------- parameters ------------------------------------
def init_ngp_params(key, scale, log2_T):
    T = 2 ** log2_T
    b = math.exp(math.log(2048 * scale / N_MIN) / (L - 1))
    level_scales = [N_MIN * (b ** l) - 1.0 for l in range(L)]
    ks = jax.random.split(key, 6)

    def winit(k, fan_in, fan_out):
        return (jax.random.normal(k, (fan_in, fan_out), jnp.float32)
                * (1.0 / math.sqrt(fan_in)))

    params = dict(
        tables=jax.random.uniform(ks[0], (L, T, F_PER_LEVEL), jnp.float32,
                                  -1e-4, 1e-4),
        wg1=winit(ks[1], ENC_DIM, GEO_HIDDEN),
        wg2=winit(ks[2], GEO_HIDDEN, GEO_OUT),
        wr1=winit(ks[3], RGB_IN, RGB_HIDDEN),
        wr2=winit(ks[4], RGB_HIDDEN, RGB_HIDDEN),
        wr3=winit(ks[5], RGB_HIDDEN, 3),
    )
    return params, level_scales, T


# ----------------------------- forward ---------------------------------------
def ngp_forward(x, d, params, scale, level_scales, T):
    xyz_min, xyz_max = -scale, scale
    xn = jnp.clip((x - xyz_min) / (xyz_max - xyz_min), 0.0, 1.0)
    feat = hash_grid_encode(xn, params["tables"], level_scales, T)
    sh = sh_encode(d)   # lane-dense (N,16) SH of normalized direction
    return _mlp_pallas(feat, sh, params["wg1"], params["wg2"],
                       params["wr1"], params["wr2"], params["wr3"])


# ----------------------------- pure-JAX reference ----------------------------
def ngp_forward_ref(x, d, params, scale, level_scales, T):
    hp = jax.lax.Precision.HIGHEST
    xn = jnp.clip((x + scale) / (2 * scale), 0.0, 1.0)
    feat = hash_grid_encode(xn, params["tables"], level_scales, T)
    h1 = jnp.maximum(jnp.dot(feat, params["wg1"], precision=hp), 0.0)
    h = jnp.dot(h1, params["wg2"], precision=hp)
    sigma = jnp.exp(h[:, 0])
    geo = h[:, 1:]
    dn = d * jax.lax.rsqrt(jnp.sum(d * d, axis=-1, keepdims=True))
    sh = jnp.concatenate(_sh4_terms(dn[:, 0:1], dn[:, 1:2], dn[:, 2:3]), axis=-1)
    rgb_in = jnp.concatenate([sh, geo], axis=-1)
    r1 = jnp.maximum(jnp.dot(rgb_in, params["wr1"], precision=hp), 0.0)
    r2 = jnp.maximum(jnp.dot(r1, params["wr2"], precision=hp), 0.0)
    rgb = jax.nn.sigmoid(jnp.dot(r2, params["wr3"], precision=hp))
    return sigma, rgb


# ----------------------------- main -------------------------------------------
if __name__ == "__main__":
    scale = 0.5
    log2_T = 15            # small hash table for the synthetic demo (ctor arg `t`)
    key = jax.random.PRNGKey(0)
    k_params, k_x, k_d = jax.random.split(key, 3)

    params, level_scales, T = init_ngp_params(k_params, scale, log2_T)

    N = 300                # deliberately not a tile multiple -> exercises padding
    x = jax.random.uniform(k_x, (N, 3), jnp.float32, -scale, scale)
    d = jax.random.normal(k_d, (N, 3), jnp.float32)

    sigmas, rgbs = ngp_forward(x, d, params, scale, level_scales, T)
    (sigmas, rgbs) = jax.block_until_ready((sigmas, rgbs))

    sig_ref, rgb_ref = ngp_forward_ref(x, d, params, scale, level_scales, T)
    np.testing.assert_allclose(np.asarray(sigmas), np.asarray(sig_ref),
                               rtol=2e-2, atol=2e-3)
    np.testing.assert_allclose(np.asarray(rgbs), np.asarray(rgb_ref),
                               rtol=2e-2, atol=2e-3)
    assert sigmas.shape == (N,) and rgbs.shape == (N, 3)
    print("KERNEL_OK")
</pallas_src>

<mosaic_0001>
module attributes {stable_mosaic.version = 11 : i64} {
  func.func @_ngp_mlp_kernel(%arg0: i32, %arg1: memref<304x48xf32, #tpu.memory_space<vmem>>, %arg2: memref<32x64xbf16, #tpu.memory_space<vmem>>, %arg3: memref<64x17xbf16, #tpu.memory_space<vmem>>, %arg4: memref<16x64xbf16, #tpu.memory_space<vmem>>, %arg5: memref<16x64xbf16, #tpu.memory_space<vmem>>, %arg6: memref<64x64xbf16, #tpu.memory_space<vmem>>, %arg7: memref<64x3xbf16, #tpu.memory_space<vmem>>, %arg8: memref<304x4xf32, #tpu.memory_space<vmem>>) attributes {dimension_semantics = [#tpu.dimension_semantics<parallel>], iteration_bounds = array<i64: 1>, scalar_prefetch = 0 : i64, scratch_operands = 0 : i64, tpu.core_type = #tpu.core_type<tc>, window_params = [{transform_indices = @transform_0, window_bounds = array<i64: 304, 48>}, {pipeline_mode = #tpu.pipeline_mode<synchronous>, transform_indices = @transform_1, window_bounds = array<i64: 32, 64>}, {pipeline_mode = #tpu.pipeline_mode<synchronous>, transform_indices = @transform_2, window_bounds = array<i64: 64, 17>}, {pipeline_mode = #tpu.pipeline_mode<synchronous>, transform_indices = @transform_3, window_bounds = array<i64: 16, 64>}, {pipeline_mode = #tpu.pipeline_mode<synchronous>, transform_indices = @transform_4, window_bounds = array<i64: 16, 64>}, {pipeline_mode = #tpu.pipeline_mode<synchronous>, transform_indices = @transform_5, window_bounds = array<i64: 64, 64>}, {pipeline_mode = #tpu.pipeline_mode<synchronous>, transform_indices = @transform_6, window_bounds = array<i64: 64, 3>}, {transform_indices = @transform_7, window_bounds = array<i64: 304, 4>}]} {
    %c0 = arith.constant 0 : index
    %c0_0 = arith.constant 0 : index
    %0 = vector.load %arg1[%c0, %c0_0] : memref<304x48xf32, #tpu.memory_space<vmem>>, vector<304x48xf32>
    %1 = vector.extract_strided_slice %0 {offsets = [0, 0], sizes = [304, 32], strides = [1, 1]} : vector<304x48xf32> to vector<304x32xf32>
    %2 = arith.truncf %1 : vector<304x32xf32> to vector<304x32xbf16>
    %3 = vector.extract_strided_slice %0 {offsets = [0, 32], sizes = [304, 16], strides = [1, 1]} : vector<304x48xf32> to vector<304x16xf32>
    %4 = arith.truncf %3 : vector<304x16xf32> to vector<304x16xbf16>
    %c0_1 = arith.constant 0 : index
    %c0_2 = arith.constant 0 : index
    %5 = vector.load %arg2[%c0_1, %c0_2] : memref<32x64xbf16, #tpu.memory_space<vmem>>, vector<32x64xbf16>
    %cst = arith.constant dense<0.000000e+00> : vector<304x64xf32>
    %6 = tpu.matmul %2, %5, %cst {dimension_numbers = #tpu.dot_dimension_numbers<[1], [0], [0], [1], [0, 0, 1, 1], [], []>} : vector<304x32xbf16>, vector<32x64xbf16>, vector<304x64xf32> -> vector<304x64xf32>
    %cst_3 = arith.constant 0.000000e+00 : f32
    %7 = vector.broadcast %cst_3 : f32 to vector<304x64xf32>
    %8 = arith.maximumf %6, %7 : vector<304x64xf32>
    %9 = arith.truncf %8 : vector<304x64xf32> to vector<304x64xbf16>
    %c0_4 = arith.constant 0 : index
    %c0_5 = arith.constant 0 : index
    %10 = vector.load %arg3[%c0_4, %c0_5] : memref<64x17xbf16, #tpu.memory_space<vmem>>, vector<64x17xbf16>
    %cst_6 = arith.constant dense<0.000000e+00> : vector<304x17xf32>
    %11 = tpu.matmul %9, %10, %cst_6 {dimension_numbers = #tpu.dot_dimension_numbers<[1], [0], [0], [1], [0, 0, 1, 1], [], []>} : vector<304x64xbf16>, vector<64x17xbf16>, vector<304x17xf32> -> vector<304x17xf32>
    %12 = vector.extract_strided_slice %11 {offsets = [0, 0], sizes = [304, 1], strides = [1, 1]} : vector<304x17xf32> to vector<304x1xf32>
    %13 = math.exp %12 : vector<304x1xf32>
    %14 = vector.extract_strided_slice %11 {offsets = [0, 1], sizes = [304, 16], strides = [1, 1]} : vector<304x17xf32> to vector<304x16xf32>
    %15 = arith.truncf %14 : vector<304x16xf32> to vector<304x16xbf16>
    %c0_7 = arith.constant 0 : index
    %c0_8 = arith.constant 0 : index
    %16 = vector.load %arg4[%c0_7, %c0_8] : memref<16x64xbf16, #tpu.memory_space<vmem>>, vector<16x64xbf16>
    %cst_9 = arith.constant dense<0.000000e+00> : vector<304x64xf32>
    %17 = tpu.matmul %4, %16, %cst_9 {dimension_numbers = #tpu.dot_dimension_numbers<[1], [0], [0], [1], [0, 0, 1, 1], [], []>} : vector<304x16xbf16>, vector<16x64xbf16>, vector<304x64xf32> -> vector<304x64xf32>
    %c0_10 = arith.constant 0 : index
    %c0_11 = arith.constant 0 : index
    %18 = vector.load %arg5[%c0_10, %c0_11] : memref<16x64xbf16, #tpu.memory_space<vmem>>, vector<16x64xbf16>
    %cst_12 = arith.constant dense<0.000000e+00> : vector<304x64xf32>
    %19 = tpu.matmul %15, %18, %cst_12 {dimension_numbers = #tpu.dot_dimension_numbers<[1], [0], [0], [1], [0, 0, 1, 1], [], []>} : vector<304x16xbf16>, vector<16x64xbf16>, vector<304x64xf32> -> vector<304x64xf32>
    %20 = arith.addf %17, %19 : vector<304x64xf32>
    %cst_13 = arith.constant 0.000000e+00 : f32
    %21 = vector.broadcast %cst_13 : f32 to vector<304x64xf32>
    %22 = arith.maximumf %20, %21 : vector<304x64xf32>
    %23 = arith.truncf %22 : vector<304x64xf32> to vector<304x64xbf16>
    %c0_14 = arith.constant 0 : index
    %c0_15 = arith.constant 0 : index
    %24 = vector.load %arg6[%c0_14, %c0_15] : memref<64x64xbf16, #tpu.memory_space<vmem>>, vector<64x64xbf16>
    %cst_16 = arith.constant dense<0.000000e+00> : vector<304x64xf32>
    %25 = tpu.matmul %23, %24, %cst_16 {dimension_numbers = #tpu.dot_dimension_numbers<[1], [0], [0], [1], [0, 0, 1, 1], [], []>} : vector<304x64xbf16>, vector<64x64xbf16>, vector<304x64xf32> -> vector<304x64xf32>
    %cst_17 = arith.constant 0.000000e+00 : f32
    %26 = vector.broadcast %cst_17 : f32 to vector<304x64xf32>
    %27 = arith.maximumf %25, %26 : vector<304x64xf32>
    %28 = arith.truncf %27 : vector<304x64xf32> to vector<304x64xbf16>
    %c0_18 = arith.constant 0 : index
    %c0_19 = arith.constant 0 : index
    %29 = vector.load %arg7[%c0_18, %c0_19] : memref<64x3xbf16, #tpu.memory_space<vmem>>, vector<64x3xbf16>
    %cst_20 = arith.constant dense<0.000000e+00> : vector<304x3xf32>
    %30 = tpu.matmul %28, %29, %cst_20 {dimension_numbers = #tpu.dot_dimension_numbers<[1], [0], [0], [1], [0, 0, 1, 1], [], []>} : vector<304x64xbf16>, vector<64x3xbf16>, vector<304x3xf32> -> vector<304x3xf32>
    %31 = arith.negf %30 : vector<304x3xf32>
    %32 = math.exp %31 : vector<304x3xf32>
    %cst_21 = arith.constant 1.000000e+00 : f32
    %33 = vector.broadcast %cst_21 : f32 to vector<304x3xf32>
    %34 = arith.addf %33, %32 : vector<304x3xf32>
    %35 = arith.divf %33, %34 : vector<304x3xf32>
    %c0_22 = arith.constant 0 : index
    %c0_23 = arith.constant 0 : index
    %36 = vector.load %arg8[%c0_22, %c0_23] : memref<304x4xf32, #tpu.memory_space<vmem>>, vector<304x1xf32>
    tpu.vector_store %arg8[%c0_22, %c0_23], %13 {strides = array<i32>} : memref<304x4xf32, #tpu.memory_space<vmem>>, vector<304x1xf32>,
    %c0_24 = arith.constant 0 : index
    %c1 = arith.constant 1 : index
    %37 = vector.load %arg8[%c0_24, %c1] : memref<304x4xf32, #tpu.memory_space<vmem>>, vector<304x3xf32>
    tpu.vector_store %arg8[%c0_24, %c1], %35 {strides = array<i32>} : memref<304x4xf32, #tpu.memory_space<vmem>>, vector<304x3xf32>,
    return
  }
  func.func @transform_0(%arg0: i32) -> (i32, i32) {
    %c0_i32 = arith.constant 0 : i32
    %c0_i32_0 = arith.constant 0 : i32
    return %arg0, %c0_i32 : i32, i32
  }
  func.func @transform_1(%arg0: i32) -> (i32, i32) {
    %c0_i32 = arith.constant 0 : i32
    %c0_i32_0 = arith.constant 0 : i32
    %c0_i32_1 = arith.constant 0 : i32
    return %c0_i32, %c0_i32_0 : i32, i32
  }
  func.func @transform_2(%arg0: i32) -> (i32, i32) {
    %c0_i32 = arith.constant 0 : i32
    %c0_i32_0 = arith.constant 0 : i32
    %c0_i32_1 = arith.constant 0 : i32
    return %c0_i32, %c0_i32_0 : i32, i32
  }
  func.func @transform_3(%arg0: i32) -> (i32, i32) {
    %c0_i32 = arith.constant 0 : i32
    %c0_i32_0 = arith.constant 0 : i32
    %c0_i32_1 = arith.constant 0 : i32
    return %c0_i32, %c0_i32_0 : i32, i32
  }
  func.func @transform_4(%arg0: i32) -> (i32, i32) {
    %c0_i32 = arith.constant 0 : i32
    %c0_i32_0 = arith.constant 0 : i32
    %c0_i32_1 = arith.constant 0 : i32
    return %c0_i32, %c0_i32_0 : i32, i32
  }
  func.func @transform_5(%arg0: i32) -> (i32, i32) {
    %c0_i32 = arith.constant 0 : i32
    %c0_i32_0 = arith.constant 0 : i32
    %c0_i32_1 = arith.constant 0 : i32
    return %c0_i32, %c0_i32_0 : i32, i32
  }
  func.func @transform_6(%arg0: i32) -> (i32, i32) {
    %c0_i32 = arith.constant 0 : i32
    %c0_i32_0 = arith.constant 0 : i32
    %c0_i32_1 = arith.constant 0 : i32
    return %c0_i32, %c0_i32_0 : i32, i32
  }
  func.func @transform_7(%arg0: i32) -> (i32, i32) {
    %c0_i32 = arith.constant 0 : i32
    %c0_i32_0 = arith.constant 0 : i32
    return %arg0, %c0_i32 : i32, i32
  }
}

</mosaic_0001>

<llo_original>
// kernel: tpu_custom_call.1
$region0: #{tpu_custom_call.1}
  #allocation0 [shape = 'u32[]', space=smem, size = 0x4, offset = 0x4, fixed_abs, tag = 'smem constant byte address 0x4 - core index']
  #allocation1 [shape = 'u32[144,128]{1,0:T(1,128)}', space=vmem, size = 0x12000, scoped, tag = 'internal scratch']
  %s0 = inlined_call_operand.vmem [shape: f32[304,48], index: 0, kind: input, shape index: {}]
  %s1 = inlined_call_operand.vmem [shape: bf16[32,64], index: 1, kind: input, shape index: {}]
  %s2 = inlined_call_operand.vmem [shape: bf16[64,17], index: 2, kind: input, shape index: {}]
  %s3 = inlined_call_operand.vmem [shape: bf16[16,64], index: 3, kind: input, shape index: {}]
  %s4 = inlined_call_operand.vmem [shape: bf16[16,64], index: 4, kind: input, shape index: {}]
  %s5 = inlined_call_operand.vmem [shape: bf16[64,64], index: 5, kind: input, shape index: {}]
  %s6 = inlined_call_operand.vmem [shape: bf16[64,3], index: 6, kind: input, shape index: {}]
  %s7 = inlined_call_operand.vmem [shape: f32[304,4], index: 7, kind: output, shape index: {}]
  %s8 = sld [smem:[#allocation0]]
  $region38: #{tpu_custom_call.1} parent=0
    _
  %s10 = ssub.s32 1, %s8
  %s11 = scalar_select 0, %s10, %s8
  // Predicated region
  $region2: #{tpu_custom_call.1} parent=0 // pred_check
    _
  $region3: #{tpu_custom_call.1} parent=0 // pred_check_branch
    %13 = sbr.rel (0) target = $region5
  $region4: #{tpu_custom_call.1} parent=0 // pred_region
    _
  $region5: #{tpu_custom_call.1} parent=0 // pred_fallthru
    _
  // Predicated region
  $region6: #{tpu_custom_call.1} parent=0 // pred_check
    _
  $region7: #{tpu_custom_call.1} parent=0 // pred_check_branch
    %15 = sbr.rel (0) target = $region9
  $region8: #{tpu_custom_call.1} parent=0 // pred_region
    _
  $region9: #{tpu_custom_call.1} parent=0 // pred_fallthru
    _
  // Predicated region
  $region10: #{tpu_custom_call.1} parent=0 // pred_check
    _
  $region11: #{tpu_custom_call.1} parent=0 // pred_check_branch
    %17 = sbr.rel (0) target = $region13
  $region12: #{tpu_custom_call.1} parent=0 // pred_region
    _
  $region13: #{tpu_custom_call.1} parent=0 // pred_fallthru
    _
  // Predicated region
  $region14: #{tpu_custom_call.1} parent=0 // pred_check
    _
  $region15: #{tpu_custom_call.1} parent=0 // pred_check_branch
    %19 = sbr.rel (0) target = $region17
  $region16: #{tpu_custom_call.1} parent=0 // pred_region
    _
  $region17: #{tpu_custom_call.1} parent=0 // pred_fallthru
    _
  // Predicated region
  $region18: #{tpu_custom_call.1} parent=0 // pred_check
    _
  $region19: #{tpu_custom_call.1} parent=0 // pred_check_branch
    %21 = sbr.rel (0) target = $region21
  $region20: #{tpu_custom_call.1} parent=0 // pred_region
    _
  $region21: #{tpu_custom_call.1} parent=0 // pred_fallthru
    _
  // Predicated region
  $region22: #{tpu_custom_call.1} parent=0 // pred_check
    _
  $region23: #{tpu_custom_call.1} parent=0 // pred_check_branch
    %23 = sbr.rel (0) target = $region25
  $region24: #{tpu_custom_call.1} parent=0 // pred_region
    _
  $region25: #{tpu_custom_call.1} parent=0 // pred_fallthru
    _
  // Predicated region
  $region26: #{tpu_custom_call.1} parent=0 // pred_check
    _
  $region27: #{tpu_custom_call.1} parent=0 // pred_check_branch
    %25 = sbr.rel (0) target = $region29
  $region28: #{tpu_custom_call.1} parent=0 // pred_region
    _
  $region29: #{tpu_custom_call.1} parent=0 // pred_fallthru
    _
  %v27 = vld [vmem:[%s0] sm:$0xff]
  %v28 = vld [vmem:[%s0 + $0x8] sm:$0xff]
  %v29 = vld [vmem:[%s0 + $0x10] sm:$0xff]
  %v30 = vld [vmem:[%s0 + $0x18] sm:$0xff]
  %v31 = vld [vmem:[%s0 + $0x20] sm:$0xff]
  %v32 = vld [vmem:[%s0 + $0x28] sm:$0xff]
  %v33 = vld [vmem:[%s0 + $0x30] sm:$0xff]
  %v34 = vld [vmem:[%s0 + $0x38] sm:$0xff]
  %v35 = vld [vmem:[%s0 + $0x40] sm:$0xff]
  %v36 = vld [vmem:[%s0 + $0x48] sm:$0xff]
  %v37 = vld [vmem:[%s0 + $0x50] sm:$0xff]
  %v38 = vld [vmem:[%s0 + $0x58] sm:$0xff]
  %v39 = vld [vmem:[%s0 + $0x60] sm:$0xff]
  %v40 = vld [vmem:[%s0 + $0x68] sm:$0xff]
  %v41 = vld [vmem:[%s0 + $0x70] sm:$0xff]
  %v42 = vld [vmem:[%s0 + $0x78] sm:$0xff]
  %v43 = vld [vmem:[%s0 + $0x80] sm:$0xff]
  %v44 = vld [vmem:[%s0 + $0x88] sm:$0xff]
  %v45 = vld [vmem:[%s0 + $0x90] sm:$0xff]
  %v46 = vld [vmem:[%s0 + $0x98] sm:$0xff]
  %v47 = vld [vmem:[%s0 + $0xa0] sm:$0xff]
  %v48 = vld [vmem:[%s0 + $0xa8] sm:$0xff]
  %v49 = vld [vmem:[%s0 + $0xb0] sm:$0xff]
  %v50 = vld [vmem:[%s0 + $0xb8] sm:$0xff]
  %v51 = vld [vmem:[%s0 + $0xc0] sm:$0xff]
  %v52 = vld [vmem:[%s0 + $0xc8] sm:$0xff]
  %v53 = vld [vmem:[%s0 + $0xd0] sm:$0xff]
  %v54 = vld [vmem:[%s0 + $0xd8] sm:$0xff]
  %v55 = vld [vmem:[%s0 + $0xe0] sm:$0xff]
  %v56 = vld [vmem:[%s0 + $0xe8] sm:$0xff]
  %v57 = vld [vmem:[%s0 + $0xf0] sm:$0xff]
  %v58 = vld [vmem:[%s0 + $0xf8] sm:$0xff]
  %v59 = vld [vmem:[%s0 + $0x100] sm:$0xff]
  %v60 = vld [vmem:[%s0 + $0x108] sm:$0xff]
  %v61 = vld [vmem:[%s0 + $0x110] sm:$0xff]
  %v62 = vld [vmem:[%s0 + $0x118] sm:$0xff]
  %v63 = vld [vmem:[%s0 + $0x120] sm:$0xff]
  %v64 = vld [vmem:[%s0 + $0x128] sm:$0xff]
  %v65 = vpack.c.bf16 %v28, %v27
  %v66 = vpack.c.bf16 %v30, %v29
  %v67 = vpack.c.bf16 %v32, %v31
  %v68 = vpack.c.bf16 %v34, %v33
  %v69 = vpack.c.bf16 %v36, %v35
  %v70 = vpack.c.bf16 %v38, %v37
  %v71 = vpack.c.bf16 %v40, %v39
  %v72 = vpack.c.bf16 %v42, %v41
  %v73 = vpack.c.bf16 %v44, %v43
  %v74 = vpack.c.bf16 %v46, %v45
  %v75 = vpack.c.bf16 %v48, %v47
  %v76 = vpack.c.bf16 %v50, %v49
  %v77 = vpack.c.bf16 %v52, %v51
  %v78 = vpack.c.bf16 %v54, %v53
  %v79 = vpack.c.bf16 %v56, %v55
  %v80 = vpack.c.bf16 %v58, %v57
  %v81 = vpack.c.bf16 %v60, %v59
  %v82 = vpack.c.bf16 %v62, %v61
  %v83 = vpack.c.bf16 %v64, %v63
  %v84 = vld [vmem:[%s1] sm:$0xf]
  %v85 = vld [vmem:[%s1 + $0x4] sm:$0xf]
  %v86 = vld [vmem:[%s1 + $0x8] sm:$0xf]
  %v87 = vld [vmem:[%s1 + $0xc] sm:$0xf]
  %v92 = vunpack.c.l.b16 %v84
  %v93 = vunpack.c.l.b16 %v85
  %v94 = vunpack.c.l.b16 %v86
  %v95 = vunpack.c.l.b16 %v87
  %v96 = vpack.c.b16 %v93, %v92
  %v97 = vpack.c.b16 %v95, %v94
  %vm100 = vcmask 261120
  %v102 = vsel %vm100, %v65, 0
  %v105 = vsel %vm100, %v66, 0
  %v108 = vsel %vm100, %v67, 0
  %v111 = vsel %vm100, %v68, 0
  %v114 = vsel %vm100, %v69, 0
  %v117 = vsel %vm100, %v70, 0
  %v120 = vsel %vm100, %v71, 0
  %v123 = vsel %vm100, %v72, 0
  %v126 = vsel %vm100, %v73, 0
  %v129 = vsel %vm100, %v74, 0
  %v132 = vsel %vm100, %v75, 0
  %v135 = vsel %vm100, %v76, 0
  %v138 = vsel %vm100, %v77, 0
  %v141 = vsel %vm100, %v78, 0
  %v144 = vsel %vm100, %v79, 0
  %v147 = vsel %vm100, %v80, 0
  %v150 = vsel %vm100, %v81, 0
  %v153 = vsel %vm100, %v82, 0
  %v156 = vsel %vm100, %v83, 0
  %158 = vmatprep.subr.bf16.mxu0 0
  %159 = vmatpush1.bf16.msra.mxu0 0
  %160 = vmatprep.subr.bf16.mxu0 0
  %161 = vmatpush1.bf16.msra.mxu0 0
  %162 = vmatprep.subr.bf16.mxu0 0
  %163 = vmatpush1.bf16.msra.mxu0 0
  %164 = vmatprep.subr.bf16.mxu0 0
  %165 = vmatpush1.bf16.msra.mxu0 0
  %166 = vmatprep.subr.bf16.mxu0 0
  %167 = vmatpush1.bf16.msra.mxu0 0
  %168 = vmatprep.subr.bf16.mxu0 0
  %169 = vmatpush1.bf16.msra.mxu0 0
  %170 = vmatprep.subr.bf16.mxu0 0
  %171 = vmatpush1.bf16.msra.mxu0 %v97
  %172 = vmatprep.subr.bf16.mxu0 0
  %173 = vmatpush1.bf16.msra.mxu0 %v96
  %174 = vmatprep.subr.bf16.mxu0 0
  %175 = vmatpush2.bf16.msra.mxu0 0
  %176 = vmatprep.subr.bf16.mxu0 0
  %177 = vmatpush2.bf16.msra.mxu0 0
  %178 = vmatprep.subr.bf16.mxu0 0
  %179 = vmatpush2.bf16.msra.mxu0 0
  %180 = vmatprep.subr.bf16.mxu0 0
  %181 = vmatpush2.bf16.msra.mxu0 0
  %182 = vmatprep.subr.bf16.mxu0 0
  %183 = vmatpush2.bf16.msra.mxu0 0
  %184 = vmatprep.subr.bf16.mxu0 0
  %185 = vmatpush2.bf16.msra.mxu0 0
  %186 = vmatprep.subr.bf16.mxu0 0
  %187 = vmatpush2.bf16.msra.mxu0 0
  %188 = vmatprep.subr.bf16.mxu0 0
  %189 = vmatpush2.bf16.msra.mxu0 0
  %190 = vmatprep.mubr.bf16.mxu0 0
  %191 = vmatmul.mubr.bf16.gmra.mxu0 %v102
  %v192 = vpop.f32.mrf.mxu0
  %v193 = vadd.f32 0.0, %v192
  %v194 = vpop.f32.mrf.mxu0
  %v195 = vpop.f32.mrf.mxu0
  %v196 = vadd.f32 0.0, %v195
  %v197 = vpop.f32.mrf.mxu0
  %198 = vmatprep.mubr.bf16.mxu0 0
  %199 = vmatmul.mubr.bf16.gmra.mxu0 %v105
  %v200 = vpop.f32.mrf.mxu0
  %v201 = vadd.f32 0.0, %v200
  %v202 = vpop.f32.mrf.mxu0
  %v203 = vpop.f32.mrf.mxu0
  %v204 = vadd.f32 0.0, %v203
  %v205 = vpop.f32.mrf.mxu0
  %206 = vmatprep.mubr.bf16.mxu0 0
  %207 = vmatmul.mubr.bf16.gmra.mxu0 %v108
  %v208 = vpop.f32.mrf.mxu0
  %v209 = vadd.f32 0.0, %v208
  %v210 = vpop.f32.mrf.mxu0
  %v211 = vpop.f32.mrf.mxu0
  %v212 = vadd.f32 0.0, %v211
  %v213 = vpop.f32.mrf.mxu0
  %214 = vmatprep.mubr.bf16.mxu0 0
  %215 = vmatmul.mubr.bf16.gmra.mxu0 %v111
  %v216 = vpop.f32.mrf.mxu0
  %v217 = vadd.f32 0.0, %v216
  %v218 = vpop.f32.mrf.mxu0
  %v219 = vpop.f32.mrf.mxu0
  %v220 = vadd.f32 0.0, %v219
  %v221 = vpop.f32.mrf.mxu0
  %222 = vmatprep.mubr.bf16.mxu0 0
  %223 = vmatmul.mubr.bf16.gmra.mxu0 %v114
  %v224 = vpop.f32.mrf.mxu0
  %v225 = vadd.f32 0.0, %v224
  %v226 = vpop.f32.mrf.mxu0
  %v227 = vpop.f32.mrf.mxu0
  %v228 = vadd.f32 0.0, %v227
  %v229 = vpop.f32.mrf.mxu0
  %230 = vmatprep.mubr.bf16.mxu0 0
  %231 = vmatmul.mubr.bf16.gmra.mxu0 %v117
  %v232 = vpop.f32.mrf.mxu0
  %v233 = vadd.f32 0.0, %v232
  %v234 = vpop.f32.mrf.mxu0
  %v235 = vpop.f32.mrf.mxu0
  %v236 = vadd.f32 0.0, %v235
  %v237 = vpop.f32.mrf.mxu0
  %238 = vmatprep.mubr.bf16.mxu0 0
  %239 = vmatmul.mubr.bf16.gmra.mxu0 %v120
  %v240 = vpop.f32.mrf.mxu0
  %v241 = vadd.f32 0.0, %v240
  %v242 = vpop.f32.mrf.mxu0
  %v243 = vpop.f32.mrf.mxu0
  %v244 = vadd.f32 0.0, %v243
  %v245 = vpop.f32.mrf.mxu0
  %246 = vmatprep.mubr.bf16.mxu0 0
  %247 = vmatmul.mubr.bf16.gmra.mxu0 %v123
  %v248 = vpop.f32.mrf.mxu0
  %v249 = vadd.f32 0.0, %v248
  %v250 = vpop.f32.mrf.mxu0
  %v251 = vpop.f32.mrf.mxu0
  %v252 = vadd.f32 0.0, %v251
  %v253 = vpop.f32.mrf.mxu0
  %254 = vmatprep.mubr.bf16.mxu0 0
  %255 = vmatmul.mubr.bf16.gmra.mxu0 %v126
  %v256 = vpop.f32.mrf.mxu0
  %v257 = vadd.f32 0.0, %v256
  %v258 = vpop.f32.mrf.mxu0
  %v259 = vpop.f32.mrf.mxu0
  %v260 = vadd.f32 0.0, %v259
  %v261 = vpop.f32.mrf.mxu0
  %262 = vmatprep.mubr.bf16.mxu0 0
  %263 = vmatmul.mubr.bf16.gmra.mxu0 %v129
  %v264 = vpop.f32.mrf.mxu0
  %v265 = vadd.f32 0.0, %v264
  %v266 = vpop.f32.mrf.mxu0
  %v267 = vpop.f32.mrf.mxu0
  %v268 = vadd.f32 0.0, %v267
  %v269 = vpop.f32.mrf.mxu0
  %270 = vmatprep.mubr.bf16.mxu0 0
  %271 = vmatmul.mubr.bf16.gmra.mxu0 %v132
  %v272 = vpop.f32.mrf.mxu0
  %v273 = vadd.f32 0.0, %v272
  %v274 = vpop.f32.mrf.mxu0
  %v275 = vpop.f32.mrf.mxu0
  %v276 = vadd.f32 0.0, %v275
  %v277 = vpop.f32.mrf.mxu0
  %278 = vmatprep.mubr.bf16.mxu0 0
  %279 = vmatmul.mubr.bf16.gmra.mxu0 %v135
  %v280 = vpop.f32.mrf.mxu0
  %v281 = vadd.f32 0.0, %v280
  %v282 = vpop.f32.mrf.mxu0
  %v283 = vpop.f32.mrf.mxu0
  %v284 = vadd.f32 0.0, %v283
  %v285 = vpop.f32.mrf.mxu0
  %286 = vmatprep.mubr.bf16.mxu0 0
  %287 = vmatmul.mubr.bf16.gmra.mxu0 %v138
  %v288 = vpop.f32.mrf.mxu0
  %v289 = vadd.f32 0.0, %v288
  %v290 = vpop.f32.mrf.mxu0
  %v291 = vpop.f32.mrf.mxu0
  %v292 = vadd.f32 0.0, %v291
  %v293 = vpop.f32.mrf.mxu0
  %294 = vmatprep.mubr.bf16.mxu0 0
  %295 = vmatmul.mubr.bf16.gmra.mxu0 %v141
  %v296 = vpop.f32.mrf.mxu0
  %v297 = vadd.f32 0.0, %v296
  %v298 = vpop.f32.mrf.mxu0
  %v299 = vpop.f32.mrf.mxu0
  %v300 = vadd.f32 0.0, %v299
  %v301 = vpop.f32.mrf.mxu0
  %302 = vmatprep.mubr.bf16.mxu0 0
  %303 = vmatmul.mubr.bf16.gmra.mxu0 %v144
  %v304 = vpop.f32.mrf.mxu0
  %v305 = vadd.f32 0.0, %v304
  %v306 = vpop.f32.mrf.mxu0
  %v307 = vpop.f32.mrf.mxu0
  %v308 = vadd.f32 0.0, %v307
  %v309 = vpop.f32.mrf.mxu0
  %310 = vmatprep.mubr.bf16.mxu0 0
  %311 = vmatmul.mubr.bf16.gmra.mxu0 %v147
  %v312 = vpop.f32.mrf.mxu0
  %v313 = vadd.f32 0.0, %v312
  %v314 = vpop.f32.mrf.mxu0
  %v315 = vpop.f32.mrf.mxu0
  %v316 = vadd.f32 0.0, %v315
  %v317 = vpop.f32.mrf.mxu0
  %318 = vmatprep.mubr.bf16.mxu0 0
  %319 = vmatmul.mubr.bf16.gmra.mxu0 %v150
  %v320 = vpop.f32.mrf.mxu0
  %v321 = vadd.f32 0.0, %v320
  %v322 = vpop.f32.mrf.mxu0
  %v323 = vpop.f32.mrf.mxu0
  %v324 = vadd.f32 0.0, %v323
  %v325 = vpop.f32.mrf.mxu0
  %326 = vmatprep.mubr.bf16.mxu0 0
  %327 = vmatmul.mubr.bf16.gmra.mxu0 %v153
  %v328 = vpop.f32.mrf.mxu0
  %v329 = vadd.f32 0.0, %v328
  %v330 = vpop.f32.mrf.mxu0
  %v331 = vpop.f32.mrf.mxu0
  %v332 = vadd.f32 0.0, %v331
  %v333 = vpop.f32.mrf.mxu0
  %334 = vmatprep.mubr.bf16.mxu0 0
  %335 = vmatmul.mubr.bf16.gmra.mxu0 %v156
  %v336 = vpop.f32.mrf.mxu0
  %v337 = vadd.f32 0.0, %v336
  %v338 = vpop.f32.mrf.mxu0
  %v339 = vpop.f32.mrf.mxu0
  %v340 = vadd.f32 0.0, %v339
  %v341 = vpop.f32.mrf.mxu0
  %342 = vdwg.mxu0
  %v343 = vmax.f32 %v193, 0.0
  %v344 = vmax.f32 %v196, 0.0
  %v345 = vmax.f32 %v201, 0.0
  %v346 = vmax.f32 %v204, 0.0
  %v347 = vmax.f32 %v209, 0.0
  %v348 = vmax.f32 %v212, 0.0
  %v349 = vmax.f32 %v217, 0.0
  %v350 = vmax.f32 %v220, 0.0
  %v351 = vmax.f32 %v225, 0.0
  %v352 = vmax.f32 %v228, 0.0
  %v353 = vmax.f32 %v233, 0.0
  %v354 = vmax.f32 %v236, 0.0
  %v355 = vmax.f32 %v241, 0.0
  %v356 = vmax.f32 %v244, 0.0
  %v357 = vmax.f32 %v249, 0.0
  %v358 = vmax.f32 %v252, 0.0
  %v359 = vmax.f32 %v257, 0.0
  %v360 = vmax.f32 %v260, 0.0
  %v361 = vmax.f32 %v265, 0.0
  %v362 = vmax.f32 %v268, 0.0
  %v363 = vmax.f32 %v273, 0.0
  %v364 = vmax.f32 %v276, 0.0
  %v365 = vmax.f32 %v281, 0.0
  %v366 = vmax.f32 %v284, 0.0
  %v367 = vmax.f32 %v289, 0.0
  %v368 = vmax.f32 %v292, 0.0
  %v369 = vmax.f32 %v297, 0.0
  %v370 = vmax.f32 %v300, 0.0
  %v371 = vmax.f32 %v305, 0.0
  %v372 = vmax.f32 %v308, 0.0
  %v373 = vmax.f32 %v313, 0.0
  %v374 = vmax.f32 %v316, 0.0
  %v375 = vmax.f32 %v321, 0.0
  %v376 = vmax.f32 %v324, 0.0
  %v377 = vmax.f32 %v329, 0.0
  %v378 = vmax.f32 %v332, 0.0
  %v379 = vmax.f32 %v337, 0.0
  %v380 = vmax.f32 %v340, 0.0
  %v381 = vpack.c.bf16 %v344, %v343
  %v382 = vpack.c.bf16 %v346, %v345
  %v383 = vpack.c.bf16 %v348, %v347
  %v384 = vpack.c.bf16 %v350, %v349
  %v385 = vpack.c.bf16 %v352, %v351
  %v386 = vpack.c.bf16 %v354, %v353
  %v387 = vpack.c.bf16 %v356, %v355
  %v388 = vpack.c.bf16 %v358, %v357
  %v389 = vpack.c.bf16 %v360, %v359
  %v390 = vpack.c.bf16 %v362, %v361
  %v391 = vpack.c.bf16 %v364, %v363
  %v392 = vpack.c.bf16 %v366, %v365
  %v393 = vpack.c.bf16 %v368, %v367
  %v394 = vpack.c.bf16 %v370, %v369
  %v395 = vpack.c.bf16 %v372, %v371
  %v396 = vpack.c.bf16 %v374, %v373
  %v397 = vpack.c.bf16 %v376, %v375
  %v398 = vpack.c.bf16 %v378, %v377
  %v399 = vpack.c.bf16 %v380, %v379
  %v400 = vld [vmem:[%s2] sm:$0xf]
  %v401 = vld [vmem:[%s2 + $0x4] sm:$0xf]
  %v402 = vld [vmem:[%s2 + $0x8] sm:$0xf]
  %v403 = vld [vmem:[%s2 + $0xc] sm:$0xf]
  %v404 = vld [vmem:[%s2 + $0x10] sm:$0xf]
  %v405 = vld [vmem:[%s2 + $0x14] sm:$0xf]
  %v406 = vld [vmem:[%s2 + $0x18] sm:$0xf]
  %v407 = vld [vmem:[%s2 + $0x1c] sm:$0xf]
  %v416 = vunpack.c.l.b16 %v400
  %v417 = vunpack.c.l.b16 %v401
  %v418 = vunpack.c.l.b16 %v402
  %v419 = vunpack.c.l.b16 %v403
  %v420 = vunpack.c.l.b16 %v404
  %v421 = vunpack.c.l.b16 %v405
  %v422 = vunpack.c.l.b16 %v406
  %v423 = vunpack.c.l.b16 %v407
  %v424 = vpack.c.b16 %v417, %v416
  %v425 = vpack.c.b16 %v419, %v418
  %v426 = vpack.c.b16 %v421, %v420
  %v427 = vpack.c.b16 %v423, %v422
  %vm432 = vcmask 523264
  %v434 = vsel %vm432, %v381, 0
  %v437 = vsel %vm432, %v382, 0
  %v440 = vsel %vm432, %v383, 0
  %v443 = vsel %vm432, %v384, 0
  %v446 = vsel %vm432, %v385, 0
  %v449 = vsel %vm432, %v386, 0
  %v452 = vsel %vm432, %v387, 0
  %v455 = vsel %vm432, %v388, 0
  %v458 = vsel %vm432, %v389, 0
  %v461 = vsel %vm432, %v390, 0
  %v464 = vsel %vm432, %v391, 0
  %v467 = vsel %vm432, %v392, 0
  %v470 = vsel %vm432, %v393, 0
  %v473 = vsel %vm432, %v394, 0
  %v476 = vsel %vm432, %v395, 0
  %v479 = vsel %vm432, %v396, 0
  %v482 = vsel %vm432, %v397, 0
  %v485 = vsel %vm432, %v398, 0
  %v488 = vsel %vm432, %v399, 0
  %490 = vmatprep.subr.bf16.mxu0 0
  %491 = vmatpush1.bf16.msra.mxu0 0
  %492 = vmatprep.subr.bf16.mxu0 0
  %493 = vmatpush1.bf16.msra.mxu0 0
  %494 = vmatprep.subr.bf16.mxu0 0
  %495 = vmatpush1.bf16.msra.mxu0 0
  %496 = vmatprep.subr.bf16.mxu0 0
  %497 = vmatpush1.bf16.msra.mxu0 0
  %498 = vmatprep.subr.bf16.mxu0 0
  %499 = vmatpush1.bf16.msra.mxu0 %v427
  %500 = vmatprep.subr.bf16.mxu0 0
  %501 = vmatpush1.bf16.msra.mxu0 %v426
  %502 = vmatprep.subr.bf16.mxu0 0
  %503 = vmatpush1.bf16.msra.mxu0 %v425
  %504 = vmatprep.subr.bf16.mxu0 0
  %505 = vmatpush1.bf16.msra.mxu0 %v424
  %506 = vmatprep.subr.bf16.mxu0 0
  %507 = vmatpush2.bf16.msra.mxu0 0
  %508 = vmatprep.subr.bf16.mxu0 0
  %509 = vmatpush2.bf16.msra.mxu0 0
  %510 = vmatprep.subr.bf16.mxu0 0
  %511 = vmatpush2.bf16.msra.mxu0 0
  %512 = vmatprep.subr.bf16.mxu0 0
  %513 = vmatpush2.bf16.msra.mxu0 0
  %514 = vmatprep.subr.bf16.mxu0 0
  %515 = vmatpush2.bf16.msra.mxu0 0
  %516 = vmatprep.subr.bf16.mxu0 0
  %517 = vmatpush2.bf16.msra.mxu0 0
  %518 = vmatprep.subr.bf16.mxu0 0
  %519 = vmatpush2.bf16.msra.mxu0 0
  %520 = vmatprep.subr.bf16.mxu0 0
  %521 = vmatpush2.bf16.msra.mxu0 0
  %522 = vmatprep.mubr.bf16.mxu0 0
  %523 = vmatmul.mubr.bf16.gmra.mxu0 %v434
  %v524 = vpop.f32.mrf.mxu0
  %v525 = vadd.f32 0.0, %v524
  %v526 = vpop.f32.mrf.mxu0
  %v527 = vpop.f32.mrf.mxu0
  %v528 = vadd.f32 0.0, %v527
  %v529 = vpop.f32.mrf.mxu0
  %530 = vmatprep.mubr.bf16.mxu0 0
  %531 = vmatmul.mubr.bf16.gmra.mxu0 %v437
  %v532 = vpop.f32.mrf.mxu0
  %v533 = vadd.f32 0.0, %v532
  %v534 = vpop.f32.mrf.mxu0
  %v535 = vpop.f32.mrf.mxu0
  %v536 = vadd.f32 0.0, %v535
  %v537 = vpop.f32.mrf.mxu0
  %538 = vmatprep.mubr.bf16.mxu0 0
  %539 = vmatmul.mubr.bf16.gmra.mxu0 %v440
  %v540 = vpop.f32.mrf.mxu0
  %v541 = vadd.f32 0.0, %v540
  %v542 = vpop.f32.mrf.mxu0
  %v543 = vpop.f32.mrf.mxu0
  %v544 = vadd.f32 0.0, %v543
  %v545 = vpop.f32.mrf.mxu0
  %546 = vmatprep.mubr.bf16.mxu0 0
  %547 = vmatmul.mubr.bf16.gmra.mxu0 %v443
  %v548 = vpop.f32.mrf.mxu0
  %v549 = vadd.f32 0.0, %v548
  %v550 = vpop.f32.mrf.mxu0
  %v551 = vpop.f32.mrf.mxu0
  %v552 = vadd.f32 0.0, %v551
  %v553 = vpop.f32.mrf.mxu0
  %554 = vmatprep.mubr.bf16.mxu0 0
  %555 = vmatmul.mubr.bf16.gmra.mxu0 %v446
  %v556 = vpop.f32.mrf.mxu0
  %v557 = vadd.f32 0.0, %v556
  %v558 = vpop.f32.mrf.mxu0
  %v559 = vpop.f32.mrf.mxu0
  %v560 = vadd.f32 0.0, %v559
  %v561 = vpop.f32.mrf.mxu0
  %562 = vmatprep.mubr.bf16.mxu0 0
  %563 = vmatmul.mubr.bf16.gmra.mxu0 %v449
  %v564 = vpop.f32.mrf.mxu0
  %v565 = vadd.f32 0.0, %v564
  %v566 = vpop.f32.mrf.mxu0
  %v567 = vpop.f32.mrf.mxu0
  %v568 = vadd.f32 0.0, %v567
  %v569 = vpop.f32.mrf.mxu0
  %570 = vmatprep.mubr.bf16.mxu0 0
  %571 = vmatmul.mubr.bf16.gmra.mxu0 %v452
  %v572 = vpop.f32.mrf.mxu0
  %v573 = vadd.f32 0.0, %v572
  %v574 = vpop.f32.mrf.mxu0
  %v575 = vpop.f32.mrf.mxu0
  %v576 = vadd.f32 0.0, %v575
  %v577 = vpop.f32.mrf.mxu0
  %578 = vmatprep.mubr.bf16.mxu0 0
  %579 = vmatmul.mubr.bf16.gmra.mxu0 %v455
  %v580 = vpop.f32.mrf.mxu0
  %v581 = vadd.f32 0.0, %v580
  %v582 = vpop.f32.mrf.mxu0
  %v583 = vpop.f32.mrf.mxu0
  %v584 = vadd.f32 0.0, %v583
  %v585 = vpop.f32.mrf.mxu0
  %586 = vmatprep.mubr.bf16.mxu0 0
  %587 = vmatmul.mubr.bf16.gmra.mxu0 %v458
  %v588 = vpop.f32.mrf.mxu0
  %v589 = vadd.f32 0.0, %v588
  %v590 = vpop.f32.mrf.mxu0
  %v591 = vpop.f32.mrf.mxu0
  %v592 = vadd.f32 0.0, %v591
  %v593 = vpop.f32.mrf.mxu0
  %594 = vmatprep.mubr.bf16.mxu0 0
  %595 = vmatmul.mubr.bf16.gmra.mxu0 %v461
  %v596 = vpop.f32.mrf.mxu0
  %v597 = vadd.f32 0.0, %v596
  %v598 = vpop.f32.mrf.mxu0
  %v599 = vpop.f32.mrf.mxu0
  %v600 = vadd.f32 0.0, %v599
  %v601 = vpop.f32.mrf.mxu0
  %602 = vmatprep.mubr.bf16.mxu0 0
  %603 = vmatmul.mubr.bf16.gmra.mxu0 %v464
  %v604 = vpop.f32.mrf.mxu0
  %v605 = vadd.f32 0.0, %v604
  %v606 = vpop.f32.mrf.mxu0
  %v607 = vpop.f32.mrf.mxu0
  %v608 = vadd.f32 0.0, %v607
  %v609 = vpop.f32.mrf.mxu0
  %610 = vmatprep.mubr.bf16.mxu0 0
  %611 = vmatmul.mubr.bf16.gmra.mxu0 %v467
  %v612 = vpop.f32.mrf.mxu0
  %v613 = vadd.f32 0.0, %v612
  %v614 = vpop.f32.mrf.mxu0
  %v615 = vpop.f32.mrf.mxu0
  %v616 = vadd.f32 0.0, %v615
  %v617 = vpop.f32.mrf.mxu0
  %618 = vmatprep.mubr.bf16.mxu0 0
  %619 = vmatmul.mubr.bf16.gmra.mxu0 %v470
  %v620 = vpop.f32.mrf.mxu0
  %v621 = vadd.f32 0.0, %v620
  %v622 = vpop.f32.mrf.mxu0
  %v623 = vpop.f32.mrf.mxu0
  %v624 = vadd.f32 0.0, %v623
  %v625 = vpop.f32.mrf.mxu0
  %626 = vmatprep.mubr.bf16.mxu0 0
  %627 = vmatmul.mubr.bf16.gmra.mxu0 %v473
  %v628 = vpop.f32.mrf.mxu0
  %v629 = vadd.f32 0.0, %v628
  %v630 = vpop.f32.mrf.mxu0
  %v631 = vpop.f32.mrf.mxu0
  %v632 = vadd.f32 0.0, %v631
  %v633 = vpop.f32.mrf.mxu0
  %634 = vmatprep.mubr.bf16.mxu0 0
  %635 = vmatmul.mubr.bf16.gmra.mxu0 %v476
  %v636 = vpop.f32.mrf.mxu0
  %v637 = vadd.f32 0.0, %v636
  %v638 = vpop.f32.mrf.mxu0
  %v639 = vpop.f32.mrf.mxu0
  %v640 = vadd.f32 0.0, %v639
  %v641 = vpop.f32.mrf.mxu0
  %642 = vmatprep.mubr.bf16.mxu0 0
  %643 = vmatmul.mubr.bf16.gmra.mxu0 %v479
  %v644 = vpop.f32.mrf.mxu0
  %v645 = vadd.f32 0.0, %v644
  %v646 = vpop.f32.mrf.mxu0
  %v647 = vpop.f32.mrf.mxu0
  %v648 = vadd.f32 0.0, %v647
  %v649 = vpop.f32.mrf.mxu0
  %650 = vmatprep.mubr.bf16.mxu0 0
  %651 = vmatmul.mubr.bf16.gmra.mxu0 %v482
  %v652 = vpop.f32.mrf.mxu0
  %v653 = vadd.f32 0.0, %v652
  %v654 = vpop.f32.mrf.mxu0
  %v655 = vpop.f32.mrf.mxu0
  %v656 = vadd.f32 0.0, %v655
  %v657 = vpop.f32.mrf.mxu0
  %658 = vmatprep.mubr.bf16.mxu0 0
  %659 = vmatmul.mubr.bf16.gmra.mxu0 %v485
  %v660 = vpop.f32.mrf.mxu0
  %v661 = vadd.f32 0.0, %v660
  %v662 = vpop.f32.mrf.mxu0
  %v663 = vpop.f32.mrf.mxu0
  %v664 = vadd.f32 0.0, %v663
  %v665 = vpop.f32.mrf.mxu0
  %666 = vmatprep.mubr.bf16.mxu0 0
  %667 = vmatmul.mubr.bf16.gmra.mxu0 %v488
  %v668 = vpop.f32.mrf.mxu0
  %v669 = vadd.f32 0.0, %v668
  %v670 = vpop.f32.mrf.mxu0
  %v671 = vpop.f32.mrf.mxu0
  %v672 = vadd.f32 0.0, %v671
  %v673 = vpop.f32.mrf.mxu0
  %674 = vdwg.mxu0
  %v675 = vmul.f32 %v525, 1.442695
  %v676 = vpow.pop %v675
  %v677 = vmul.f32 %v528, 1.442695
  %v678 = vpow.pop %v677
  %v679 = vmul.f32 %v533, 1.442695
  %v680 = vpow.pop %v679
  %v681 = vmul.f32 %v536, 1.442695
  %v682 = vpow.pop %v681
  %v683 = vmul.f32 %v541, 1.442695
  %v684 = vpow.pop %v683
  %v685 = vmul.f32 %v544, 1.442695
  %v686 = vpow.pop %v685
  %v687 = vmul.f32 %v549, 1.442695
  %v688 = vpow.pop %v687
  %v689 = vmul.f32 %v552, 1.442695
  %v690 = vpow.pop %v689
  %v691 = vmul.f32 %v557, 1.442695
  %v692 = vpow.pop %v691
  %v693 = vmul.f32 %v560, 1.442695
  %v694 = vpow.pop %v693
  %v695 = vmul.f32 %v565, 1.442695
  %v696 = vpow.pop %v695
  %v697 = vmul.f32 %v568, 1.442695
  %v698 = vpow.pop %v697
  %v699 = vmul.f32 %v573, 1.442695
  %v700 = vpow.pop %v699
  %v701 = vmul.f32 %v576, 1.442695
  %v702 = vpow.pop %v701
  %v703 = vmul.f32 %v581, 1.442695
  %v704 = vpow.pop %v703
  %v705 = vmul.f32 %v584, 1.442695
  %v706 = vpow.pop %v705
  %v707 = vmul.f32 %v589, 1.442695
  %v708 = vpow.pop %v707
  %v709 = vmul.f32 %v592, 1.442695
  %v710 = vpow.pop %v709
  %v711 = vmul.f32 %v597, 1.442695
  %v712 = vpow.pop %v711
  %v713 = vmul.f32 %v600, 1.442695
  %v714 = vpow.pop %v713
  %v715 = vmul.f32 %v605, 1.442695
  %v716 = vpow.pop %v715
  %v717 = vmul.f32 %v608, 1.442695
  %v718 = vpow.pop %v717
  %v719 = vmul.f32 %v613, 1.442695
  %v720 = vpow.pop %v719
  %v721 = vmul.f32 %v616, 1.442695
  %v722 = vpow.pop %v721
  %v723 = vmul.f32 %v621, 1.442695
  %v724 = vpow.pop %v723
  %v725 = vmul.f32 %v624, 1.442695
  %v726 = vpow.pop %v725
  %v727 = vmul.f32 %v629, 1.442695
  %v728 = vpow.pop %v727
  %v729 = vmul.f32 %v632, 1.442695
  %v730 = vpow.pop %v729
  %v731 = vmul.f32 %v637, 1.442695
  %v732 = vpow.pop %v731
  %v733 = vmul.f32 %v640, 1.442695
  %v734 = vpow.pop %v733
  %v735 = vmul.f32 %v645, 1.442695
  %v736 = vpow.pop %v735
  %v737 = vmul.f32 %v648, 1.442695
  %v738 = vpow.pop %v737
  %v739 = vmul.f32 %v653, 1.442695
  %v740 = vpow.pop %v739
  %v741 = vmul.f32 %v656, 1.442695
  %v742 = vpow.pop %v741
  %v743 = vmul.f32 %v661, 1.442695
  %v744 = vpow.pop %v743
  %v745 = vmul.f32 %v664, 1.442695
  %v746 = vpow.pop %v745
  %v747 = vmul.f32 %v669, 1.442695
  %v748 = vpow.pop %v747
  %v749 = vmul.f32 %v672, 1.442695
  %v750 = vpow.pop %v749
  %v751 = vpack.c.bf16 %v528, %v525
  %v752 = vpack.c.bf16 %v536, %v533
  %v753 = vpack.c.bf16 %v544, %v541
  %v754 = vpack.c.bf16 %v552, %v549
  %v755 = vpack.c.bf16 %v560, %v557
  %v756 = vpack.c.bf16 %v568, %v565
  %v757 = vpack.c.bf16 %v576, %v573
  %v758 = vpack.c.bf16 %v584, %v581
  %v759 = vpack.c.bf16 %v592, %v589
  %v760 = vpack.c.bf16 %v600, %v597
  %v761 = vpack.c.bf16 %v608, %v605
  %v762 = vpack.c.bf16 %v616, %v613
  %v763 = vpack.c.bf16 %v624, %v621
  %v764 = vpack.c.bf16 %v632, %v629
  %v765 = vpack.c.bf16 %v640, %v637
  %v766 = vpack.c.bf16 %v648, %v645
  %v767 = vpack.c.bf16 %v656, %v653
  %v768 = vpack.c.bf16 %v664, %v661
  %v769 = vpack.c.bf16 %v672, %v669
  %v770 = vld [vmem:[%s3] sm:$0xf]
  %v771 = vld [vmem:[%s3 + $0x4] sm:$0xf]
  %v772 = vld [vmem:[%s4] sm:$0xf]
  %v773 = vld [vmem:[%s4 + $0x4] sm:$0xf]
  %793 = vrot.lane.b32.xlu0 %v751, 127
  %v794 = vpop.permute.xlu0 %793
  %795 = vrot.lane.b32.xlu0 %v752, 127
  %v796 = vpop.permute.xlu0 %795
  %797 = vrot.lane.b32.xlu0 %v753, 127
  %v798 = vpop.permute.xlu0 %797
  %799 = vrot.lane.b32.xlu0 %v754, 127
  %v800 = vpop.permute.xlu0 %799
  %801 = vrot.lane.b32.xlu0 %v755, 127
  %v802 = vpop.permute.xlu0 %801
  %803 = vrot.lane.b32.xlu0 %v756, 127
  %v804 = vpop.permute.xlu0 %803
  %805 = vrot.lane.b32.xlu0 %v757, 127
  %v806 = vpop.permute.xlu0 %805
  %807 = vrot.lane.b32.xlu0 %v758, 127
  %v808 = vpop.permute.xlu0 %807
  %809 = vrot.lane.b32.xlu0 %v759, 127
  %v810 = vpop.permute.xlu0 %809
  %811 = vrot.lane.b32.xlu0 %v760, 127
  %v812 = vpop.permute.xlu0 %811
  %813 = vrot.lane.b32.xlu0 %v761, 127
  %v814 = vpop.permute.xlu0 %813
  %815 = vrot.lane.b32.xlu0 %v762, 127
  %v816 = vpop.permute.xlu0 %815
  %817 = vrot.lane.b32.xlu0 %v763, 127
  %v818 = vpop.permute.xlu0 %817
  %819 = vrot.lane.b32.xlu0 %v764, 127
  %v820 = vpop.permute.xlu0 %819
  %821 = vrot.lane.b32.xlu0 %v765, 127
  %v822 = vpop.permute.xlu0 %821
  %823 = vrot.lane.b32.xlu0 %v766, 127
  %v824 = vpop.permute.xlu0 %823
  %825 = vrot.lane.b32.xlu0 %v767, 127
  %v826 = vpop.permute.xlu0 %825
  %827 = vrot.lane.b32.xlu0 %v768, 127
  %v828 = vpop.permute.xlu0 %827
  %829 = vrot.lane.b32.xlu0 %v769, 127
  %v830 = vpop.permute.xlu0 %829
  %v833 = vunpack.c.l.b16 %v772
  %v834 = vunpack.c.l.b16 %v773
  %v835 = vpack.c.b16 %v834, %v833
  %vm837 = vcmask 130048
  %v839 = vsel %vm837, %v794, 0
  %v842 = vsel %vm837, %v796, 0
  %v845 = vsel %vm837, %v798, 0
  %v848 = vsel %vm837, %v800, 0
  %v851 = vsel %vm837, %v802, 0
  %v854 = vsel %vm837, %v804, 0
  %v857 = vsel %vm837, %v806, 0
  %v860 = vsel %vm837, %v808, 0
  %v863 = vsel %vm837, %v810, 0
  %v866 = vsel %vm837, %v812, 0
  %v869 = vsel %vm837, %v814, 0
  %v872 = vsel %vm837, %v816, 0
  %v875 = vsel %vm837, %v818, 0
  %v878 = vsel %vm837, %v820, 0
  %v881 = vsel %vm837, %v822, 0
  %v884 = vsel %vm837, %v824, 0
  %v887 = vsel %vm837, %v826, 0
  %v890 = vsel %vm837, %v828, 0
  %v893 = vsel %vm837, %v830, 0
  %895 = vmatprep.subr.bf16.mxu0 0
  %896 = vmatpush1.bf16.msra.mxu0 0
  %897 = vmatprep.subr.bf16.mxu0 0
  %898 = vmatpush1.bf16.msra.mxu0 0
  %899 = vmatprep.subr.bf16.mxu0 0
  %900 = vmatpush1.bf16.msra.mxu0 0
  %901 = vmatprep.subr.bf16.mxu0 0
  %902 = vmatpush1.bf16.msra.mxu0 0
  %903 = vmatprep.subr.bf16.mxu0 0
  %904 = vmatpush1.bf16.msra.mxu0 0
  %905 = vmatprep.subr.bf16.mxu0 0
  %906 = vmatpush1.bf16.msra.mxu0 0
  %907 = vmatprep.subr.bf16.mxu0 0
  %908 = vmatpush1.bf16.msra.mxu0 0
  %909 = vmatprep.subr.bf16.mxu0 0
  %910 = vmatpush1.bf16.msra.mxu0 %v835
  %911 = vmatprep.subr.bf16.mxu0 0
  %912 = vmatpush2.bf16.msra.mxu0 0
  %913 = vmatprep.subr.bf16.mxu0 0
  %914 = vmatpush2.bf16.msra.mxu0 0
  %915 = vmatprep.subr.bf16.mxu0 0
  %916 = vmatpush2.bf16.msra.mxu0 0
  %917 = vmatprep.subr.bf16.mxu0 0
  %918 = vmatpush2.bf16.msra.mxu0 0
  %919 = vmatprep.subr.bf16.mxu0 0
  %920 = vmatpush2.bf16.msra.mxu0 0
  %921 = vmatprep.subr.bf16.mxu0 0
  %922 = vmatpush2.bf16.msra.mxu0 0
  %923 = vmatprep.subr.bf16.mxu0 0
  %924 = vmatpush2.bf16.msra.mxu0 0
  %925 = vmatprep.subr.bf16.mxu0 0
  %926 = vmatpush2.bf16.msra.mxu0 0
  %927 = vmatprep.mubr.bf16.mxu0 0
  %928 = vmatmul.mubr.bf16.gmra.mxu0 %v839
  %v929 = vpop.f32.mrf.mxu0
  %v930 = vadd.f32 0.0, %v929
  %v931 = vpop.f32.mrf.mxu0
  %v932 = vpop.f32.mrf.mxu0
  %v933 = vadd.f32 0.0, %v932
  %v934 = vpop.f32.mrf.mxu0
  %935 = vmatprep.mubr.bf16.mxu0 0
  %936 = vmatmul.mubr.bf16.gmra.mxu0 %v842
  %v937 = vpop.f32.mrf.mxu0
  %v938 = vadd.f32 0.0, %v937
  %v939 = vpop.f32.mrf.mxu0
  %v940 = vpop.f32.mrf.mxu0
  %v941 = vadd.f32 0.0, %v940
  %v942 = vpop.f32.mrf.mxu0
  %943 = vmatprep.mubr.bf16.mxu0 0
  %944 = vmatmul.mubr.bf16.gmra.mxu0 %v845
  %v945 = vpop.f32.mrf.mxu0
  %v946 = vadd.f32 0.0, %v945
  %v947 = vpop.f32.mrf.mxu0
  %v948 = vpop.f32.mrf.mxu0
  %v949 = vadd.f32 0.0, %v948
  %v950 = vpop.f32.mrf.mxu0
  %951 = vmatprep.mubr.bf16.mxu0 0
  %952 = vmatmul.mubr.bf16.gmra.mxu0 %v848
  %v953 = vpop.f32.mrf.mxu0
  %v954 = vadd.f32 0.0, %v953
  %v955 = vpop.f32.mrf.mxu0
  %v956 = vpop.f32.mrf.mxu0
  %v957 = vadd.f32 0.0, %v956
  %v958 = vpop.f32.mrf.mxu0
  %959 = vmatprep.mubr.bf16.mxu0 0
  %960 = vmatmul.mubr.bf16.gmra.mxu0 %v851
  %v961 = vpop.f32.mrf.mxu0
  %v962 = vadd.f32 0.0, %v961
  %v963 = vpop.f32.mrf.mxu0
  %v964 = vpop.f32.mrf.mxu0
  %v965 = vadd.f32 0.0, %v964
  %v966 = vpop.f32.mrf.mxu0
  %967 = vmatprep.mubr.bf16.mxu0 0
  %968 = vmatmul.mubr.bf16.gmra.mxu0 %v854
  %v969 = vpop.f32.mrf.mxu0
  %v970 = vadd.f32 0.0, %v969
  %v971 = vpop.f32.mrf.mxu0
  %v972 = vpop.f32.mrf.mxu0
  %v973 = vadd.f32 0.0, %v972
  %v974 = vpop.f32.mrf.mxu0
  %975 = vmatprep.mubr.bf16.mxu0 0
  %976 = vmatmul.mubr.bf16.gmra.mxu0 %v857
  %v977 = vpop.f32.mrf.mxu0
  %v978 = vadd.f32 0.0, %v977
  %v979 = vpop.f32.mrf.mxu0
  %v980 = vpop.f32.mrf.mxu0
  %v981 = vadd.f32 0.0, %v980
  %v982 = vpop.f32.mrf.mxu0
  %983 = vmatprep.mubr.bf16.mxu0 0
  %984 = vmatmul.mubr.bf16.gmra.mxu0 %v860
  %v985 = vpop.f32.mrf.mxu0
  %v986 = vadd.f32 0.0, %v985
  %v987 = vpop.f32.mrf.mxu0
  %v988 = vpop.f32.mrf.mxu0
  %v989 = vadd.f32 0.0, %v988
  %v990 = vpop.f32.mrf.mxu0
  %991 = vmatprep.mubr.bf16.mxu0 0
  %992 = vmatmul.mubr.bf16.gmra.mxu0 %v863
  %v993 = vpop.f32.mrf.mxu0
  %v994 = vadd.f32 0.0, %v993
  %v995 = vpop.f32.mrf.mxu0
  %v996 = vpop.f32.mrf.mxu0
  %v997 = vadd.f32 0.0, %v996
  %v998 = vpop.f32.mrf.mxu0
  %999 = vmatprep.mubr.bf16.mxu0 0
  %1000 = vmatmul.mubr.bf16.gmra.mxu0 %v866
  %v1001 = vpop.f32.mrf.mxu0
  %v1002 = vadd.f32 0.0, %v1001
  %v1003 = vpop.f32.mrf.mxu0
  %v1004 = vpop.f32.mrf.mxu0
  %v1005 = vadd.f32 0.0, %v1004
  %v1006 = vpop.f32.mrf.mxu0
  %1007 = vmatprep.mubr.bf16.mxu0 0
  %1008 = vmatmul.mubr.bf16.gmra.mxu0 %v869
  %v1009 = vpop.f32.mrf.mxu0
  %v1010 = vadd.f32 0.0, %v1009
  %v1011 = vpop.f32.mrf.mxu0
  %v1012 = vpop.f32.mrf.mxu0
  %v1013 = vadd.f32 0.0, %v1012
  %v1014 = vpop.f32.mrf.mxu0
  %1015 = vmatprep.mubr.bf16.mxu0 0
  %1016 = vmatmul.mubr.bf16.gmra.mxu0 %v872
  %v1017 = vpop.f32.mrf.mxu0
  %v1018 = vadd.f32 0.0, %v1017
  %v1019 = vpop.f32.mrf.mxu0
  %v1020 = vpop.f32.mrf.mxu0
  %v1021 = vadd.f32 0.0, %v1020
  %v1022 = vpop.f32.mrf.mxu0
  %1023 = vmatprep.mubr.bf16.mxu0 0
  %1024 = vmatmul.mubr.bf16.gmra.mxu0 %v875
  %v1025 = vpop.f32.mrf.mxu0
  %v1026 = vadd.f32 0.0, %v1025
  %v1027 = vpop.f32.mrf.mxu0
  %v1028 = vpop.f32.mrf.mxu0
  %v1029 = vadd.f32 0.0, %v1028
  %v1030 = vpop.f32.mrf.mxu0
  %1031 = vmatprep.mubr.bf16.mxu0 0
  %1032 = vmatmul.mubr.bf16.gmra.mxu0 %v878
  %v1033 = vpop.f32.mrf.mxu0
  %v1034 = vadd.f32 0.0, %v1033
  %v1035 = vpop.f32.mrf.mxu0
  %v1036 = vpop.f32.mrf.mxu0
  %v1037 = vadd.f32 0.0, %v1036
  %v1038 = vpop.f32.mrf.mxu0
  %1039 = vmatprep.mubr.bf16.mxu0 0
  %1040 = vmatmul.mubr.bf16.gmra.mxu0 %v881
  %v1041 = vpop.f32.mrf.mxu0
  %v1042 = vadd.f32 0.0, %v1041
  %v1043 = vpop.f32.mrf.mxu0
  %v1044 = vpop.f32.mrf.mxu0
  %v1045 = vadd.f32 0.0, %v1044
  %v1046 = vpop.f32.mrf.mxu0
  %1047 = vmatprep.mubr.bf16.mxu0 0
  %1048 = vmatmul.mubr.bf16.gmra.mxu0 %v884
  %v1049 = vpop.f32.mrf.mxu0
  %v1050 = vadd.f32 0.0, %v1049
  %v1051 = vpop.f32.mrf.mxu0
  %v1052 = vpop.f32.mrf.mxu0
  %v1053 = vadd.f32 0.0, %v1052
  %v1054 = vpop.f32.mrf.mxu0
  %1055 = vmatprep.mubr.bf16.mxu0 0
  %1056 = vmatmul.mubr.bf16.gmra.mxu0 %v887
  %v1057 = vpop.f32.mrf.mxu0
  %v1058 = vadd.f32 0.0, %v1057
  %v1059 = vpop.f32.mrf.mxu0
  %v1060 = vpop.f32.mrf.mxu0
  %v1061 = vadd.f32 0.0, %v1060
  %v1062 = vpop.f32.mrf.mxu0
  %1063 = vmatprep.mubr.bf16.mxu0 0
  %1064 = vmatmul.mubr.bf16.gmra.mxu0 %v890
  %v1065 = vpop.f32.mrf.mxu0
  %v1066 = vadd.f32 0.0, %v1065
  %v1067 = vpop.f32.mrf.mxu0
  %v1068 = vpop.f32.mrf.mxu0
  %v1069 = vadd.f32 0.0, %v1068
  %v1070 = vpop.f32.mrf.mxu0
  %1071 = vmatprep.mubr.bf16.mxu0 0
  %1072 = vmatmul.mubr.bf16.gmra.mxu0 %v893
  %v1073 = vpop.f32.mrf.mxu0
  %v1074 = vadd.f32 0.0, %v1073
  %v1075 = vpop.f32.mrf.mxu0
  %v1076 = vpop.f32.mrf.mxu0
  %v1077 = vadd.f32 0.0, %v1076
  %v1078 = vpop.f32.mrf.mxu0
  %1079 = vdwg.mxu0
  %1099 = vrot.lane.b32.xlu0 %v65, 96
  %v1100 = vpop.permute.xlu0 %1099
  %1101 = vrot.lane.b32.xlu0 %v66, 96
  %v1102 = vpop.permute.xlu0 %1101
  %1103 = vrot.lane.b32.xlu0 %v67, 96
  %v1104 = vpop.permute.xlu0 %1103
  %1105 = vrot.lane.b32.xlu0 %v68, 96
  %v1106 = vpop.permute.xlu0 %1105
  %1107 = vrot.lane.b32.xlu0 %v69, 96
  %v1108 = vpop.permute.xlu0 %1107
  %1109 = vrot.lane.b32.xlu0 %v70, 96
  %v1110 = vpop.permute.xlu0 %1109
  %1111 = vrot.lane.b32.xlu0 %v71, 96
  %v1112 = vpop.permute.xlu0 %1111
  %1113 = vrot.lane.b32.xlu0 %v72, 96
  %v1114 = vpop.permute.xlu0 %1113
  %1115 = vrot.lane.b32.xlu0 %v73, 96
  %v1116 = vpop.permute.xlu0 %1115
  %1117 = vrot.lane.b32.xlu0 %v74, 96
  %v1118 = vpop.permute.xlu0 %1117
  %1119 = vrot.lane.b32.xlu0 %v75, 96
  %v1120 = vpop.permute.xlu0 %1119
  %1121 = vrot.lane.b32.xlu0 %v76, 96
  %v1122 = vpop.permute.xlu0 %1121
  %1123 = vrot.lane.b32.xlu0 %v77, 96
  %v1124 = vpop.permute.xlu0 %1123
  %1125 = vrot.lane.b32.xlu0 %v78, 96
  %v1126 = vpop.permute.xlu0 %1125
  %1127 = vrot.lane.b32.xlu0 %v79, 96
  %v1128 = vpop.permute.xlu0 %1127
  %1129 = vrot.lane.b32.xlu0 %v80, 96
  %v1130 = vpop.permute.xlu0 %1129
  %1131 = vrot.lane.b32.xlu0 %v81, 96
  %v1132 = vpop.permute.xlu0 %1131
  %1133 = vrot.lane.b32.xlu0 %v82, 96
  %v1134 = vpop.permute.xlu0 %1133
  %1135 = vrot.lane.b32.xlu0 %v83, 96
  %v1136 = vpop.permute.xlu0 %1135
  %v1139 = vunpack.c.l.b16 %v770
  %v1140 = vunpack.c.l.b16 %v771
  %v1141 = vpack.c.b16 %v1140, %v1139
  %v1144 = vsel %vm837, %v1100, 0
  %v1147 = vsel %vm837, %v1102, 0
  %v1150 = vsel %vm837, %v1104, 0
  %v1153 = vsel %vm837, %v1106, 0
  %v1156 = vsel %vm837, %v1108, 0
  %v1159 = vsel %vm837, %v1110, 0
  %v1162 = vsel %vm837, %v1112, 0
  %v1165 = vsel %vm837, %v1114, 0
  %v1168 = vsel %vm837, %v1116, 0
  %v1171 = vsel %vm837, %v1118, 0
  %v1174 = vsel %vm837, %v1120, 0
  %v1177 = vsel %vm837, %v1122, 0
  %v1180 = vsel %vm837, %v1124, 0
  %v1183 = vsel %vm837, %v1126, 0
  %v1186 = vsel %vm837, %v1128, 0
  %v1189 = vsel %vm837, %v1130, 0
  %v1192 = vsel %vm837, %v1132, 0
  %v1195 = vsel %vm837, %v1134, 0
  %v1198 = vsel %vm837, %v1136, 0
  %1200 = vmatprep.subr.bf16.mxu0 0
  %1201 = vmatpush1.bf16.msra.mxu0 0
  %1202 = vmatprep.subr.bf16.mxu0 0
  %1203 = vmatpush1.bf16.msra.mxu0 0
  %1204 = vmatprep.subr.bf16.mxu0 0
  %1205 = vmatpush1.bf16.msra.mxu0 0
  %1206 = vmatprep.subr.bf16.mxu0 0
  %1207 = vmatpush1.bf16.msra.mxu0 0
  %1208 = vmatprep.subr.bf16.mxu0 0
  %1209 = vmatpush1.bf16.msra.mxu0 0
  %1210 = vmatprep.subr.bf16.mxu0 0
  %1211 = vmatpush1.bf16.msra.mxu0 0
  %1212 = vmatprep.subr.bf16.mxu0 0
  %1213 = vmatpush1.bf16.msra.mxu0 0
  %1214 = vmatprep.subr.bf16.mxu0 0
  %1215 = vmatpush1.bf16.msra.mxu0 %v1141
  %1216 = vmatprep.subr.bf16.mxu0 0
  %1217 = vmatpush2.bf16.msra.mxu0 0
  %1218 = vmatprep.subr.bf16.mxu0 0
  %1219 = vmatpush2.bf16.msra.mxu0 0
  %1220 = vmatprep.subr.bf16.mxu0 0
  %1221 = vmatpush2.bf16.msra.mxu0 0
  %1222 = vmatprep.subr.bf16.mxu0 0
  %1223 = vmatpush2.bf16.msra.mxu0 0
  %1224 = vmatprep.subr.bf16.mxu0 0
  %1225 = vmatpush2.bf16.msra.mxu0 0
  %1226 = vmatprep.subr.bf16.mxu0 0
  %1227 = vmatpush2.bf16.msra.mxu0 0
  %1228 = vmatprep.subr.bf16.mxu0 0
  %1229 = vmatpush2.bf16.msra.mxu0 0
  %1230 = vmatprep.subr.bf16.mxu0 0
  %1231 = vmatpush2.bf16.msra.mxu0 0
  %1232 = vmatprep.mubr.bf16.mxu0 0
  %1233 = vmatmul.mubr.bf16.gmra.mxu0 %v1144
  %v1234 = vpop.f32.mrf.mxu0
  %v1235 = vadd.f32 %v930, %v1234
  %v1236 = vpop.f32.mrf.mxu0
  %v1237 = vpop.f32.mrf.mxu0
  %v1238 = vadd.f32 %v933, %v1237
  %v1239 = vpop.f32.mrf.mxu0
  %1240 = vmatprep.mubr.bf16.mxu0 0
  %1241 = vmatmul.mubr.bf16.gmra.mxu0 %v1147
  %v1242 = vpop.f32.mrf.mxu0
  %v1243 = vadd.f32 %v938, %v1242
  %v1244 = vpop.f32.mrf.mxu0
  %v1245 = vpop.f32.mrf.mxu0
  %v1246 = vadd.f32 %v941, %v1245
  %v1247 = vpop.f32.mrf.mxu0
  %1248 = vmatprep.mubr.bf16.mxu0 0
  %1249 = vmatmul.mubr.bf16.gmra.mxu0 %v1150
  %v1250 = vpop.f32.mrf.mxu0
  %v1251 = vadd.f32 %v946, %v1250
  %v1252 = vpop.f32.mrf.mxu0
  %v1253 = vpop.f32.mrf.mxu0
  %v1254 = vadd.f32 %v949, %v1253
  %v1255 = vpop.f32.mrf.mxu0
  %1256 = vmatprep.mubr.bf16.mxu0 0
  %1257 = vmatmul.mubr.bf16.gmra.mxu0 %v1153
  %v1258 = vpop.f32.mrf.mxu0
  %v1259 = vadd.f32 %v954, %v1258
  %v1260 = vpop.f32.mrf.mxu0
  %v1261 = vpop.f32.mrf.mxu0
  %v1262 = vadd.f32 %v957, %v1261
  %v1263 = vpop.f32.mrf.mxu0
  %1264 = vmatprep.mubr.bf16.mxu0 0
  %1265 = vmatmul.mubr.bf16.gmra.mxu0 %v1156
  %v1266 = vpop.f32.mrf.mxu0
  %v1267 = vadd.f32 %v962, %v1266
  %v1268 = vpop.f32.mrf.mxu0
  %v1269 = vpop.f32.mrf.mxu0
  %v1270 = vadd.f32 %v965, %v1269
  %v1271 = vpop.f32.mrf.mxu0
  %1272 = vmatprep.mubr.bf16.mxu0 0
  %1273 = vmatmul.mubr.bf16.gmra.mxu0 %v1159
  %v1274 = vpop.f32.mrf.mxu0
  %v1275 = vadd.f32 %v970, %v1274
  %v1276 = vpop.f32.mrf.mxu0
  %v1277 = vpop.f32.mrf.mxu0
  %v1278 = vadd.f32 %v973, %v1277
  %v1279 = vpop.f32.mrf.mxu0
  %1280 = vmatprep.mubr.bf16.mxu0 0
  %1281 = vmatmul.mubr.bf16.gmra.mxu0 %v1162
  %v1282 = vpop.f32.mrf.mxu0
  %v1283 = vadd.f32 %v978, %v1282
  %v1284 = vpop.f32.mrf.mxu0
  %v1285 = vpop.f32.mrf.mxu0
  %v1286 = vadd.f32 %v981, %v1285
  %v1287 = vpop.f32.mrf.mxu0
  %1288 = vmatprep.mubr.bf16.mxu0 0
  %1289 = vmatmul.mubr.bf16.gmra.mxu0 %v1165
  %v1290 = vpop.f32.mrf.mxu0
  %v1291 = vadd.f32 %v986, %v1290
  %v1292 = vpop.f32.mrf.mxu0
  %v1293 = vpop.f32.mrf.mxu0
  %v1294 = vadd.f32 %v989, %v1293
  %v1295 = vpop.f32.mrf.mxu0
  %1296 = vmatprep.mubr.bf16.mxu0 0
  %1297 = vmatmul.mubr.bf16.gmra.mxu0 %v1168
  %v1298 = vpop.f32.mrf.mxu0
  %v1299 = vadd.f32 %v994, %v1298
  %v1300 = vpop.f32.mrf.mxu0
  %v1301 = vpop.f32.mrf.mxu0
  %v1302 = vadd.f32 %v997, %v1301
  %v1303 = vpop.f32.mrf.mxu0
  %1304 = vmatprep.mubr.bf16.mxu0 0
  %1305 = vmatmul.mubr.bf16.gmra.mxu0 %v1171
  %v1306 = vpop.f32.mrf.mxu0
  %v1307 = vadd.f32 %v1002, %v1306
  %v1308 = vpop.f32.mrf.mxu0
  %v1309 = vpop.f32.mrf.mxu0
  %v1310 = vadd.f32 %v1005, %v1309
  %v1311 = vpop.f32.mrf.mxu0
  %1312 = vmatprep.mubr.bf16.mxu0 0
  %1313 = vmatmul.mubr.bf16.gmra.mxu0 %v1174
  %v1314 = vpop.f32.mrf.mxu0
  %v1315 = vadd.f32 %v1010, %v1314
  %v1316 = vpop.f32.mrf.mxu0
  %v1317 = vpop.f32.mrf.mxu0
  %v1318 = vadd.f32 %v1013, %v1317
  %v1319 = vpop.f32.mrf.mxu0
  %1320 = vmatprep.mubr.bf16.mxu0 0
  %1321 = vmatmul.mubr.bf16.gmra.mxu0 %v1177
  %v1322 = vpop.f32.mrf.mxu0
  %v1323 = vadd.f32 %v1018, %v1322
  %v1324 = vpop.f32.mrf.mxu0
  %v1325 = vpop.f32.mrf.mxu0
  %v1326 = vadd.f32 %v1021, %v1325
  %v1327 = vpop.f32.mrf.mxu0
  %1328 = vmatprep.mubr.bf16.mxu0 0
  %1329 = vmatmul.mubr.bf16.gmra.mxu0 %v1180
  %v1330 = vpop.f32.mrf.mxu0
  %v1331 = vadd.f32 %v1026, %v1330
  %v1332 = vpop.f32.mrf.mxu0
  %v1333 = vpop.f32.mrf.mxu0
  %v1334 = vadd.f32 %v1029, %v1333
  %v1335 = vpop.f32.mrf.mxu0
  %1336 = vmatprep.mubr.bf16.mxu0 0
  %1337 = vmatmul.mubr.bf16.gmra.mxu0 %v1183
  %v1338 = vpop.f32.mrf.mxu0
  %v1339 = vadd.f32 %v1034, %v1338
  %v1340 = vpop.f32.mrf.mxu0
  %v1341 = vpop.f32.mrf.mxu0
  %v1342 = vadd.f32 %v1037, %v1341
  %v1343 = vpop.f32.mrf.mxu0
  %1344 = vmatprep.mubr.bf16.mxu0 0
  %1345 = vmatmul.mubr.bf16.gmra.mxu0 %v1186
  %v1346 = vpop.f32.mrf.mxu0
  %v1347 = vadd.f32 %v1042, %v1346
  %v1348 = vpop.f32.mrf.mxu0
  %v1349 = vpop.f32.mrf.mxu0
  %v1350 = vadd.f32 %v1045, %v1349
  %v1351 = vpop.f32.mrf.mxu0
  %1352 = vmatprep.mubr.bf16.mxu0 0
  %1353 = vmatmul.mubr.bf16.gmra.mxu0 %v1189
  %v1354 = vpop.f32.mrf.mxu0
  %v1355 = vadd.f32 %v1050, %v1354
  %v1356 = vpop.f32.mrf.mxu0
  %v1357 = vpop.f32.mrf.mxu0
  %v1358 = vadd.f32 %v1053, %v1357
  %v1359 = vpop.f32.mrf.mxu0
  %1360 = vmatprep.mubr.bf16.mxu0 0
  %1361 = vmatmul.mubr.bf16.gmra.mxu0 %v1192
  %v1362 = vpop.f32.mrf.mxu0
  %v1363 = vadd.f32 %v1058, %v1362
  %v1364 = vpop.f32.mrf.mxu0
  %v1365 = vpop.f32.mrf.mxu0
  %v1366 = vadd.f32 %v1061, %v1365
  %v1367 = vpop.f32.mrf.mxu0
  %1368 = vmatprep.mubr.bf16.mxu0 0
  %1369 = vmatmul.mubr.bf16.gmra.mxu0 %v1195
  %v1370 = vpop.f32.mrf.mxu0
  %v1371 = vadd.f32 %v1066, %v1370
  %v1372 = vpop.f32.mrf.mxu0
  %v1373 = vpop.f32.mrf.mxu0
  %v1374 = vadd.f32 %v1069, %v1373
  %v1375 = vpop.f32.mrf.mxu0
  %1376 = vmatprep.mubr.bf16.mxu0 0
  %1377 = vmatmul.mubr.bf16.gmra.mxu0 %v1198
  %v1378 = vpop.f32.mrf.mxu0
  %v1379 = vadd.f32 %v1074, %v1378
  %v1380 = vpop.f32.mrf.mxu0
  %v1381 = vpop.f32.mrf.mxu0
  %v1382 = vadd.f32 %v1077, %v1381
  %v1383 = vpop.f32.mrf.mxu0
  %1384 = vdwg.mxu0
  %v1385 = vmax.f32 %v1235, 0.0
  %v1386 = vmax.f32 %v1238, 0.0
  %v1387 = vmax.f32 %v1243, 0.0
  %v1388 = vmax.f32 %v1246, 0.0
  %v1389 = vmax.f32 %v1251, 0.0
  %v1390 = vmax.f32 %v1254, 0.0
  %v1391 = vmax.f32 %v1259, 0.0
  %v1392 = vmax.f32 %v1262, 0.0
  %v1393 = vmax.f32 %v1267, 0.0
  %v1394 = vmax.f32 %v1270, 0.0
  %v1395 = vmax.f32 %v1275, 0.0
  %v1396 = vmax.f32 %v1278, 0.0
  %v1397 = vmax.f32 %v1283, 0.0
  %v1398 = vmax.f32 %v1286, 0.0
  %v1399 = vmax.f32 %v1291, 0.0
  %v1400 = vmax.f32 %v1294, 0.0
  %v1401 = vmax.f32 %v1299, 0.0
  %v1402 = vmax.f32 %v1302, 0.0
  %v1403 = vmax.f32 %v1307, 0.0
  %v1404 = vmax.f32 %v1310, 0.0
  %v1405 = vmax.f32 %v1315, 0.0
  %v1406 = vmax.f32 %v1318, 0.0
  %v1407 = vmax.f32 %v1323, 0.0
  %v1408 = vmax.f32 %v1326, 0.0
  %v1409 = vmax.f32 %v1331, 0.0
  %v1410 = vmax.f32 %v1334, 0.0
  %v1411 = vmax.f32 %v1339, 0.0
  %v1412 = vmax.f32 %v1342, 0.0
  %v1413 = vmax.f32 %v1347, 0.0
  %v1414 = vmax.f32 %v1350, 0.0
  %v1415 = vmax.f32 %v1355, 0.0
  %v1416 = vmax.f32 %v1358, 0.0
  %v1417 = vmax.f32 %v1363, 0.0
  %v1418 = vmax.f32 %v1366, 0.0
  %v1419 = vmax.f32 %v1371, 0.0
  %v1420 = vmax.f32 %v1374, 0.0
  %v1421 = vmax.f32 %v1379, 0.0
  %v1422 = vmax.f32 %v1382, 0.0
  %v1423 = vpack.c.bf16 %v1386, %v1385
  %v1424 = vpack.c.bf16 %v1388, %v1387
  %v1425 = vpack.c.bf16 %v1390, %v1389
  %v1426 = vpack.c.bf16 %v1392, %v1391
  %v1427 = vpack.c.bf16 %v1394, %v1393
  %v1428 = vpack.c.bf16 %v1396, %v1395
  %v1429 = vpack.c.bf16 %v1398, %v1397
  %v1430 = vpack.c.bf16 %v1400, %v1399
  %v1431 = vpack.c.bf16 %v1402, %v1401
  %v1432 = vpack.c.bf16 %v1404, %v1403
  %v1433 = vpack.c.bf16 %v1406, %v1405
  %v1434 = vpack.c.bf16 %v1408, %v1407
  %v1435 = vpack.c.bf16 %v1410, %v1409
  %v1436 = vpack.c.bf16 %v1412, %v1411
  %v1437 = vpack.c.bf16 %v1414, %v1413
  %v1438 = vpack.c.bf16 %v1416, %v1415
  %v1439 = vpack.c.bf16 %v1418, %v1417
  %v1440 = vpack.c.bf16 %v1420, %v1419
  %v1441 = vpack.c.bf16 %v1422, %v1421
  %v1442 = vld [vmem:[%s5] sm:$0xf]
  %v1443 = vld [vmem:[%s5 + $0x4] sm:$0xf]
  %v1444 = vld [vmem:[%s5 + $0x8] sm:$0xf]
  %v1445 = vld [vmem:[%s5 + $0xc] sm:$0xf]
  %v1446 = vld [vmem:[%s5 + $0x10] sm:$0xf]
  %v1447 = vld [vmem:[%s5 + $0x14] sm:$0xf]
  %v1448 = vld [vmem:[%s5 + $0x18] sm:$0xf]
  %v1449 = vld [vmem:[%s5 + $0x1c] sm:$0xf]
  %v1458 = vunpack.c.l.b16 %v1442
  %v1459 = vunpack.c.l.b16 %v1443
  %v1460 = vunpack.c.l.b16 %v1444
  %v1461 = vunpack.c.l.b16 %v1445
  %v1462 = vunpack.c.l.b16 %v1446
  %v1463 = vunpack.c.l.b16 %v1447
  %v1464 = vunpack.c.l.b16 %v1448
  %v1465 = vunpack.c.l.b16 %v1449
  %v1466 = vpack.c.b16 %v1459, %v1458
  %v1467 = vpack.c.b16 %v1461, %v1460
  %v1468 = vpack.c.b16 %v1463, %v1462
  %v1469 = vpack.c.b16 %v1465, %v1464
  %v1475 = vsel %vm432, %v1423, 0
  %v1478 = vsel %vm432, %v1424, 0
  %v1481 = vsel %vm432, %v1425, 0
  %v1484 = vsel %vm432, %v1426, 0
  %v1487 = vsel %vm432, %v1427, 0
  %v1490 = vsel %vm432, %v1428, 0
  %v1493 = vsel %vm432, %v1429, 0
  %v1496 = vsel %vm432, %v1430, 0
  %v1499 = vsel %vm432, %v1431, 0
  %v1502 = vsel %vm432, %v1432, 0
  %v1505 = vsel %vm432, %v1433, 0
  %v1508 = vsel %vm432, %v1434, 0
  %v1511 = vsel %vm432, %v1435, 0
  %v1514 = vsel %vm432, %v1436, 0
  %v1517 = vsel %vm432, %v1437, 0
  %v1520 = vsel %vm432, %v1438, 0
  %v1523 = vsel %vm432, %v1439, 0
  %v1526 = vsel %vm432, %v1440, 0
  %v1529 = vsel %vm432, %v1441, 0
  %1531 = vmatprep.subr.bf16.mxu0 0
  %1532 = vmatpush1.bf16.msra.mxu0 0
  %1533 = vmatprep.subr.bf16.mxu0 0
  %1534 = vmatpush1.bf16.msra.mxu0 0
  %1535 = vmatprep.subr.bf16.mxu0 0
  %1536 = vmatpush1.bf16.msra.mxu0 0
  %1537 = vmatprep.subr.bf16.mxu0 0
  %1538 = vmatpush1.bf16.msra.mxu0 0
  %1539 = vmatprep.subr.bf16.mxu0 0
  %1540 = vmatpush1.bf16.msra.mxu0 %v1469
  %1541 = vmatprep.subr.bf16.mxu0 0
  %1542 = vmatpush1.bf16.msra.mxu0 %v1468
  %1543 = vmatprep.subr.bf16.mxu0 0
  %1544 = vmatpush1.bf16.msra.mxu0 %v1467
  %1545 = vmatprep.subr.bf16.mxu0 0
  %1546 = vmatpush1.bf16.msra.mxu0 %v1466
  %1547 = vmatprep.subr.bf16.mxu0 0
  %1548 = vmatpush2.bf16.msra.mxu0 0
  %1549 = vmatprep.subr.bf16.mxu0 0
  %1550 = vmatpush2.bf16.msra.mxu0 0
  %1551 = vmatprep.subr.bf16.mxu0 0
  %1552 = vmatpush2.bf16.msra.mxu0 0
  %1553 = vmatprep.subr.bf16.mxu0 0
  %1554 = vmatpush2.bf16.msra.mxu0 0
  %1555 = vmatprep.subr.bf16.mxu0 0
  %1556 = vmatpush2.bf16.msra.mxu0 0
  %1557 = vmatprep.subr.bf16.mxu0 0
  %1558 = vmatpush2.bf16.msra.mxu0 0
  %1559 = vmatprep.subr.bf16.mxu0 0
  %1560 = vmatpush2.bf16.msra.mxu0 0
  %1561 = vmatprep.subr.bf16.mxu0 0
  %1562 = vmatpush2.bf16.msra.mxu0 0
  %1563 = vmatprep.mubr.bf16.mxu0 0
  %1564 = vmatmul.mubr.bf16.gmra.mxu0 %v1475
  %v1565 = vpop.f32.mrf.mxu0
  %v1566 = vadd.f32 0.0, %v1565
  %v1567 = vpop.f32.mrf.mxu0
  %v1568 = vpop.f32.mrf.mxu0
  %v1569 = vadd.f32 0.0, %v1568
  %v1570 = vpop.f32.mrf.mxu0
  %1571 = vmatprep.mubr.bf16.mxu0 0
  %1572 = vmatmul.mubr.bf16.gmra.mxu0 %v1478
  %v1573 = vpop.f32.mrf.mxu0
  %v1574 = vadd.f32 0.0, %v1573
  %v1575 = vpop.f32.mrf.mxu0
  %v1576 = vpop.f32.mrf.mxu0
  %v1577 = vadd.f32 0.0, %v1576
  %v1578 = vpop.f32.mrf.mxu0
  %1579 = vmatprep.mubr.bf16.mxu0 0
  %1580 = vmatmul.mubr.bf16.gmra.mxu0 %v1481
  %v1581 = vpop.f32.mrf.mxu0
  %v1582 = vadd.f32 0.0, %v1581
  %v1583 = vpop.f32.mrf.mxu0
  %v1584 = vpop.f32.mrf.mxu0
  %v1585 = vadd.f32 0.0, %v1584
  %v1586 = vpop.f32.mrf.mxu0
  %1587 = vmatprep.mubr.bf16.mxu0 0
  %1588 = vmatmul.mubr.bf16.gmra.mxu0 %v1484
  %v1589 = vpop.f32.mrf.mxu0
  %v1590 = vadd.f32 0.0, %v1589
  %v1591 = vpop.f32.mrf.mxu0
  %v1592 = vpop.f32.mrf.mxu0
  %v1593 = vadd.f32 0.0, %v1592
  %v1594 = vpop.f32.mrf.mxu0
  %1595 = vmatprep.mubr.bf16.mxu0 0
  %1596 = vmatmul.mubr.bf16.gmra.mxu0 %v1487
  %v1597 = vpop.f32.mrf.mxu0
  %v1598 = vadd.f32 0.0, %v1597
  %v1599 = vpop.f32.mrf.mxu0
  %v1600 = vpop.f32.mrf.mxu0
  %v1601 = vadd.f32 0.0, %v1600
  %v1602 = vpop.f32.mrf.mxu0
  %1603 = vmatprep.mubr.bf16.mxu0 0
  %1604 = vmatmul.mubr.bf16.gmra.mxu0 %v1490
  %v1605 = vpop.f32.mrf.mxu0
  %v1606 = vadd.f32 0.0, %v1605
  %v1607 = vpop.f32.mrf.mxu0
  %v1608 = vpop.f32.mrf.mxu0
  %v1609 = vadd.f32 0.0, %v1608
  %v1610 = vpop.f32.mrf.mxu0
  %1611 = vmatprep.mubr.bf16.mxu0 0
  %1612 = vmatmul.mubr.bf16.gmra.mxu0 %v1493
  %v1613 = vpop.f32.mrf.mxu0
  %v1614 = vadd.f32 0.0, %v1613
  %v1615 = vpop.f32.mrf.mxu0
  %v1616 = vpop.f32.mrf.mxu0
  %v1617 = vadd.f32 0.0, %v1616
  %v1618 = vpop.f32.mrf.mxu0
  %1619 = vmatprep.mubr.bf16.mxu0 0
  %1620 = vmatmul.mubr.bf16.gmra.mxu0 %v1496
  %v1621 = vpop.f32.mrf.mxu0
  %v1622 = vadd.f32 0.0, %v1621
  %v1623 = vpop.f32.mrf.mxu0
  %v1624 = vpop.f32.mrf.mxu0
  %v1625 = vadd.f32 0.0, %v1624
  %v1626 = vpop.f32.mrf.mxu0
  %1627 = vmatprep.mubr.bf16.mxu0 0
  %1628 = vmatmul.mubr.bf16.gmra.mxu0 %v1499
  %v1629 = vpop.f32.mrf.mxu0
  %v1630 = vadd.f32 0.0, %v1629
  %v1631 = vpop.f32.mrf.mxu0
  %v1632 = vpop.f32.mrf.mxu0
  %v1633 = vadd.f32 0.0, %v1632
  %v1634 = vpop.f32.mrf.mxu0
  %1635 = vmatprep.mubr.bf16.mxu0 0
  %1636 = vmatmul.mubr.bf16.gmra.mxu0 %v1502
  %v1637 = vpop.f32.mrf.mxu0
  %v1638 = vadd.f32 0.0, %v1637
  %v1639 = vpop.f32.mrf.mxu0
  %v1640 = vpop.f32.mrf.mxu0
  %v1641 = vadd.f32 0.0, %v1640
  %v1642 = vpop.f32.mrf.mxu0
  %1643 = vmatprep.mubr.bf16.mxu0 0
  %1644 = vmatmul.mubr.bf16.gmra.mxu0 %v1505
  %v1645 = vpop.f32.mrf.mxu0
  %v1646 = vadd.f32 0.0, %v1645
  %v1647 = vpop.f32.mrf.mxu0
  %v1648 = vpop.f32.mrf.mxu0
  %v1649 = vadd.f32 0.0, %v1648
  %v1650 = vpop.f32.mrf.mxu0
  %1651 = vmatprep.mubr.bf16.mxu0 0
  %1652 = vmatmul.mubr.bf16.gmra.mxu0 %v1508
  %v1653 = vpop.f32.mrf.mxu0
  %v1654 = vadd.f32 0.0, %v1653
  %v1655 = vpop.f32.mrf.mxu0
  %v1656 = vpop.f32.mrf.mxu0
  %v1657 = vadd.f32 0.0, %v1656
  %v1658 = vpop.f32.mrf.mxu0
  %1659 = vmatprep.mubr.bf16.mxu0 0
  %1660 = vmatmul.mubr.bf16.gmra.mxu0 %v1511
  %v1661 = vpop.f32.mrf.mxu0
  %v1662 = vadd.f32 0.0, %v1661
  %v1663 = vpop.f32.mrf.mxu0
  %v1664 = vpop.f32.mrf.mxu0
  %v1665 = vadd.f32 0.0, %v1664
  %v1666 = vpop.f32.mrf.mxu0
  %1667 = vmatprep.mubr.bf16.mxu0 0
  %1668 = vmatmul.mubr.bf16.gmra.mxu0 %v1514
  %v1669 = vpop.f32.mrf.mxu0
  %v1670 = vadd.f32 0.0, %v1669
  %v1671 = vpop.f32.mrf.mxu0
  %v1672 = vpop.f32.mrf.mxu0
  %v1673 = vadd.f32 0.0, %v1672
  %v1674 = vpop.f32.mrf.mxu0
  %1675 = vmatprep.mubr.bf16.mxu0 0
  %1676 = vmatmul.mubr.bf16.gmra.mxu0 %v1517
  %v1677 = vpop.f32.mrf.mxu0
  %v1678 = vadd.f32 0.0, %v1677
  %v1679 = vpop.f32.mrf.mxu0
  %v1680 = vpop.f32.mrf.mxu0
  %v1681 = vadd.f32 0.0, %v1680
  %v1682 = vpop.f32.mrf.mxu0
  %1683 = vmatprep.mubr.bf16.mxu0 0
  %1684 = vmatmul.mubr.bf16.gmra.mxu0 %v1520
  %v1685 = vpop.f32.mrf.mxu0
  %v1686 = vadd.f32 0.0, %v1685
  %v1687 = vpop.f32.mrf.mxu0
  %v1688 = vpop.f32.mrf.mxu0
  %v1689 = vadd.f32 0.0, %v1688
  %v1690 = vpop.f32.mrf.mxu0
  %1691 = vmatprep.mubr.bf16.mxu0 0
  %1692 = vmatmul.mubr.bf16.gmra.mxu0 %v1523
  %v1693 = vpop.f32.mrf.mxu0
  %v1694 = vadd.f32 0.0, %v1693
  %v1695 = vpop.f32.mrf.mxu0
  %v1696 = vpop.f32.mrf.mxu0
  %v1697 = vadd.f32 0.0, %v1696
  %v1698 = vpop.f32.mrf.mxu0
  %1699 = vmatprep.mubr.bf16.mxu0 0
  %1700 = vmatmul.mubr.bf16.gmra.mxu0 %v1526
  %v1701 = vpop.f32.mrf.mxu0
  %v1702 = vadd.f32 0.0, %v1701
  %v1703 = vpop.f32.mrf.mxu0
  %v1704 = vpop.f32.mrf.mxu0
  %v1705 = vadd.f32 0.0, %v1704
  %v1706 = vpop.f32.mrf.mxu0
  %1707 = vmatprep.mubr.bf16.mxu0 0
  %1708 = vmatmul.mubr.bf16.gmra.mxu0 %v1529
  %v1709 = vpop.f32.mrf.mxu0
  %v1710 = vadd.f32 0.0, %v1709
  %v1711 = vpop.f32.mrf.mxu0
  %v1712 = vpop.f32.mrf.mxu0
  %v1713 = vadd.f32 0.0, %v1712
  %v1714 = vpop.f32.mrf.mxu0
  %1715 = vdwg.mxu0
  %v1716 = vmax.f32 %v1566, 0.0
  %v1717 = vmax.f32 %v1569, 0.0
  %v1718 = vmax.f32 %v1574, 0.0
  %v1719 = vmax.f32 %v1577, 0.0
  %v1720 = vmax.f32 %v1582, 0.0
  %v1721 = vmax.f32 %v1585, 0.0
  %v1722 = vmax.f32 %v1590, 0.0
  %v1723 = vmax.f32 %v1593, 0.0
  %v1724 = vmax.f32 %v1598, 0.0
  %v1725 = vmax.f32 %v1601, 0.0
  %v1726 = vmax.f32 %v1606, 0.0
  %v1727 = vmax.f32 %v1609, 0.0
  %v1728 = vmax.f32 %v1614, 0.0
  %v1729 = vmax.f32 %v1617, 0.0
  %v1730 = vmax.f32 %v1622, 0.0
  %v1731 = vmax.f32 %v1625, 0.0
  %v1732 = vmax.f32 %v1630, 0.0
  %v1733 = vmax.f32 %v1633, 0.0
  %v1734 = vmax.f32 %v1638, 0.0
  %v1735 = vmax.f32 %v1641, 0.0
  %v1736 = vmax.f32 %v1646, 0.0
  %v1737 = vmax.f32 %v1649, 0.0
  %v1738 = vmax.f32 %v1654, 0.0
  %v1739 = vmax.f32 %v1657, 0.0
  %v1740 = vmax.f32 %v1662, 0.0
  %v1741 = vmax.f32 %v1665, 0.0
  %v1742 = vmax.f32 %v1670, 0.0
  %v1743 = vmax.f32 %v1673, 0.0
  %v1744 = vmax.f32 %v1678, 0.0
  %v1745 = vmax.f32 %v1681, 0.0
  %v1746 = vmax.f32 %v1686, 0.0
  %v1747 = vmax.f32 %v1689, 0.0
  %v1748 = vmax.f32 %v1694, 0.0
  %v1749 = vmax.f32 %v1697, 0.0
  %v1750 = vmax.f32 %v1702, 0.0
  %v1751 = vmax.f32 %v1705, 0.0
  %v1752 = vmax.f32 %v1710, 0.0
  %v1753 = vmax.f32 %v1713, 0.0
  %v1754 = vpack.c.bf16 %v1717, %v1716
  %v1755 = vpack.c.bf16 %v1719, %v1718
  %v1756 = vpack.c.bf16 %v1721, %v1720
  %v1757 = vpack.c.bf16 %v1723, %v1722
  %v1758 = vpack.c.bf16 %v1725, %v1724
  %v1759 = vpack.c.bf16 %v1727, %v1726
  %v1760 = vpack.c.bf16 %v1729, %v1728
  %v1761 = vpack.c.bf16 %v1731, %v1730
  %v1762 = vpack.c.bf16 %v1733, %v1732
  %v1763 = vpack.c.bf16 %v1735, %v1734
  %v1764 = vpack.c.bf16 %v1737, %v1736
  %v1765 = vpack.c.bf16 %v1739, %v1738
  %v1766 = vpack.c.bf16 %v1741, %v1740
  %v1767 = vpack.c.bf16 %v1743, %v1742
  %v1768 = vpack.c.bf16 %v1745, %v1744
  %v1769 = vpack.c.bf16 %v1747, %v1746
  %v1770 = vpack.c.bf16 %v1749, %v1748
  %v1771 = vpack.c.bf16 %v1751, %v1750
  %v1772 = vpack.c.bf16 %v1753, %v1752
  %v1773 = vld [vmem:[%s6] sm:$0xf]
  %v1774 = vld [vmem:[%s6 + $0x4] sm:$0xf]
  %v1775 = vld [vmem:[%s6 + $0x8] sm:$0xf]
  %v1776 = vld [vmem:[%s6 + $0xc] sm:$0xf]
  %v1777 = vld [vmem:[%s6 + $0x10] sm:$0xf]
  %v1778 = vld [vmem:[%s6 + $0x14] sm:$0xf]
  %v1779 = vld [vmem:[%s6 + $0x18] sm:$0xf]
  %v1780 = vld [vmem:[%s6 + $0x1c] sm:$0xf]
  %v1789 = vunpack.c.l.b16 %v1773
  %v1790 = vunpack.c.l.b16 %v1774
  %v1791 = vunpack.c.l.b16 %v1775
  %v1792 = vunpack.c.l.b16 %v1776
  %v1793 = vunpack.c.l.b16 %v1777
  %v1794 = vunpack.c.l.b16 %v1778
  %v1795 = vunpack.c.l.b16 %v1779
  %v1796 = vunpack.c.l.b16 %v1780
  %v1797 = vpack.c.b16 %v1790, %v1789
  %v1798 = vpack.c.b16 %v1792, %v1791
  %v1799 = vpack.c.b16 %v1794, %v1793
  %v1800 = vpack.c.b16 %v1796, %v1795
  %v1806 = vsel %vm432, %v1754, 0
  %v1809 = vsel %vm432, %v1755, 0
  %v1812 = vsel %vm432, %v1756, 0
  %v1815 = vsel %vm432, %v1757, 0
  %v1818 = vsel %vm432, %v1758, 0
  %v1821 = vsel %vm432, %v1759, 0
  %v1824 = vsel %vm432, %v1760, 0
  %v1827 = vsel %vm432, %v1761, 0
  %v1830 = vsel %vm432, %v1762, 0
  %v1833 = vsel %vm432, %v1763, 0
  %v1836 = vsel %vm432, %v1764, 0
  %v1839 = vsel %vm432, %v1765, 0
  %v1842 = vsel %vm432, %v1766, 0
  %v1845 = vsel %vm432, %v1767, 0
  %v1848 = vsel %vm432, %v1768, 0
  %v1851 = vsel %vm432, %v1769, 0
  %v1854 = vsel %vm432, %v1770, 0
  %v1857 = vsel %vm432, %v1771, 0
  %v1860 = vsel %vm432, %v1772, 0
  %1862 = vmatprep.subr.bf16.mxu0 0
  %1863 = vmatpush1.bf16.msra.mxu0 0
  %1864 = vmatprep.subr.bf16.mxu0 0
  %1865 = vmatpush1.bf16.msra.mxu0 0
  %1866 = vmatprep.subr.bf16.mxu0 0
  %1867 = vmatpush1.bf16.msra.mxu0 0
  %1868 = vmatprep.subr.bf16.mxu0 0
  %1869 = vmatpush1.bf16.msra.mxu0 0
  %1870 = vmatprep.subr.bf16.mxu0 0
  %1871 = vmatpush1.bf16.msra.mxu0 %v1800
  %1872 = vmatprep.subr.bf16.mxu0 0
  %1873 = vmatpush1.bf16.msra.mxu0 %v1799
  %1874 = vmatprep.subr.bf16.mxu0 0
  %1875 = vmatpush1.bf16.msra.mxu0 %v1798
  %1876 = vmatprep.subr.bf16.mxu0 0
  %1877 = vmatpush1.bf16.msra.mxu0 %v1797
  %1878 = vmatprep.subr.bf16.mxu0 0
  %1879 = vmatpush2.bf16.msra.mxu0 0
  %1880 = vmatprep.subr.bf16.mxu0 0
  %1881 = vmatpush2.bf16.msra.mxu0 0
  %1882 = vmatprep.subr.bf16.mxu0 0
  %1883 = vmatpush2.bf16.msra.mxu0 0
  %1884 = vmatprep.subr.bf16.mxu0 0
  %1885 = vmatpush2.bf16.msra.mxu0 0
  %1886 = vmatprep.subr.bf16.mxu0 0
  %1887 = vmatpush2.bf16.msra.mxu0 0
  %1888 = vmatprep.subr.bf16.mxu0 0
  %1889 = vmatpush2.bf16.msra.mxu0 0
  %1890 = vmatprep.subr.bf16.mxu0 0
  %1891 = vmatpush2.bf16.msra.mxu0 0
  %1892 = vmatprep.subr.bf16.mxu0 0
  %1893 = vmatpush2.bf16.msra.mxu0 0
  %1894 = vmatprep.mubr.bf16.mxu0 0
  %1895 = vmatmul.mubr.bf16.gmra.mxu0 %v1806
  %v1896 = vpop.f32.mrf.mxu0
  %v1897 = vadd.f32 0.0, %v1896
  %v1898 = vpop.f32.mrf.mxu0
  %v1899 = vpop.f32.mrf.mxu0
  %v1900 = vadd.f32 0.0, %v1899
  %v1901 = vpop.f32.mrf.mxu0
  %1902 = vmatprep.mubr.bf16.mxu0 0
  %1903 = vmatmul.mubr.bf16.gmra.mxu0 %v1809
  %v1904 = vpop.f32.mrf.mxu0
  %v1905 = vadd.f32 0.0, %v1904
  %v1906 = vpop.f32.mrf.mxu0
  %v1907 = vpop.f32.mrf.mxu0
  %v1908 = vadd.f32 0.0, %v1907
  %v1909 = vpop.f32.mrf.mxu0
  %1910 = vmatprep.mubr.bf16.mxu0 0
  %1911 = vmatmul.mubr.bf16.gmra.mxu0 %v1812
  %v1912 = vpop.f32.mrf.mxu0
  %v1913 = vadd.f32 0.0, %v1912
  %v1914 = vpop.f32.mrf.mxu0
  %v1915 = vpop.f32.mrf.mxu0
  %v1916 = vadd.f32 0.0, %v1915
  %v1917 = vpop.f32.mrf.mxu0
  %1918 = vmatprep.mubr.bf16.mxu0 0
  %1919 = vmatmul.mubr.bf16.gmra.mxu0 %v1815
  %v1920 = vpop.f32.mrf.mxu0
  %v1921 = vadd.f32 0.0, %v1920
  %v1922 = vpop.f32.mrf.mxu0
  %v1923 = vpop.f32.mrf.mxu0
  %v1924 = vadd.f32 0.0, %v1923
  %v1925 = vpop.f32.mrf.mxu0
  %1926 = vmatprep.mubr.bf16.mxu0 0
  %1927 = vmatmul.mubr.bf16.gmra.mxu0 %v1818
  %v1928 = vpop.f32.mrf.mxu0
  %v1929 = vadd.f32 0.0, %v1928
  %v1930 = vpop.f32.mrf.mxu0
  %v1931 = vpop.f32.mrf.mxu0
  %v1932 = vadd.f32 0.0, %v1931
  %v1933 = vpop.f32.mrf.mxu0
  %1934 = vmatprep.mubr.bf16.mxu0 0
  %1935 = vmatmul.mubr.bf16.gmra.mxu0 %v1821
  %v1936 = vpop.f32.mrf.mxu0
  %v1937 = vadd.f32 0.0, %v1936
  %v1938 = vpop.f32.mrf.mxu0
  %v1939 = vpop.f32.mrf.mxu0
  %v1940 = vadd.f32 0.0, %v1939
  %v1941 = vpop.f32.mrf.mxu0
  %1942 = vmatprep.mubr.bf16.mxu0 0
  %1943 = vmatmul.mubr.bf16.gmra.mxu0 %v1824
  %v1944 = vpop.f32.mrf.mxu0
  %v1945 = vadd.f32 0.0, %v1944
  %v1946 = vpop.f32.mrf.mxu0
  %v1947 = vpop.f32.mrf.mxu0
  %v1948 = vadd.f32 0.0, %v1947
  %v1949 = vpop.f32.mrf.mxu0
  %1950 = vmatprep.mubr.bf16.mxu0 0
  %1951 = vmatmul.mubr.bf16.gmra.mxu0 %v1827
  %v1952 = vpop.f32.mrf.mxu0
  %v1953 = vadd.f32 0.0, %v1952
  %v1954 = vpop.f32.mrf.mxu0
  %v1955 = vpop.f32.mrf.mxu0
  %v1956 = vadd.f32 0.0, %v1955
  %v1957 = vpop.f32.mrf.mxu0
  %1958 = vmatprep.mubr.bf16.mxu0 0
  %1959 = vmatmul.mubr.bf16.gmra.mxu0 %v1830
  %v1960 = vpop.f32.mrf.mxu0
  %v1961 = vadd.f32 0.0, %v1960
  %v1962 = vpop.f32.mrf.mxu0
  %v1963 = vpop.f32.mrf.mxu0
  %v1964 = vadd.f32 0.0, %v1963
  %v1965 = vpop.f32.mrf.mxu0
  %1966 = vmatprep.mubr.bf16.mxu0 0
  %1967 = vmatmul.mubr.bf16.gmra.mxu0 %v1833
  %v1968 = vpop.f32.mrf.mxu0
  %v1969 = vadd.f32 0.0, %v1968
  %v1970 = vpop.f32.mrf.mxu0
  %v1971 = vpop.f32.mrf.mxu0
  %v1972 = vadd.f32 0.0, %v1971
  %v1973 = vpop.f32.mrf.mxu0
  %1974 = vmatprep.mubr.bf16.mxu0 0
  %1975 = vmatmul.mubr.bf16.gmra.mxu0 %v1836
  %v1976 = vpop.f32.mrf.mxu0
  %v1977 = vadd.f32 0.0, %v1976
  %v1978 = vpop.f32.mrf.mxu0
  %v1979 = vpop.f32.mrf.mxu0
  %v1980 = vadd.f32 0.0, %v1979
  %v1981 = vpop.f32.mrf.mxu0
  %1982 = vmatprep.mubr.bf16.mxu0 0
  %1983 = vmatmul.mubr.bf16.gmra.mxu0 %v1839
  %v1984 = vpop.f32.mrf.mxu0
  %v1985 = vadd.f32 0.0, %v1984
  %v1986 = vpop.f32.mrf.mxu0
  %v1987 = vpop.f32.mrf.mxu0
  %v1988 = vadd.f32 0.0, %v1987
  %v1989 = vpop.f32.mrf.mxu0
  %1990 = vmatprep.mubr.bf16.mxu0 0
  %1991 = vmatmul.mubr.bf16.gmra.mxu0 %v1842
  %v1992 = vpop.f32.mrf.mxu0
  %v1993 = vadd.f32 0.0, %v1992
  %v1994 = vpop.f32.mrf.mxu0
  %v1995 = vpop.f32.mrf.mxu0
  %v1996 = vadd.f32 0.0, %v1995
  %v1997 = vpop.f32.mrf.mxu0
  %1998 = vmatprep.mubr.bf16.mxu0 0
  %1999 = vmatmul.mubr.bf16.gmra.mxu0 %v1845
  %v2000 = vpop.f32.mrf.mxu0
  %v2001 = vadd.f32 0.0, %v2000
  %v2002 = vpop.f32.mrf.mxu0
  %v2003 = vpop.f32.mrf.mxu0
  %v2004 = vadd.f32 0.0, %v2003
  %v2005 = vpop.f32.mrf.mxu0
  %2006 = vmatprep.mubr.bf16.mxu0 0
  %2007 = vmatmul.mubr.bf16.gmra.mxu0 %v1848
  %v2008 = vpop.f32.mrf.mxu0
  %v2009 = vadd.f32 0.0, %v2008
  %v2010 = vpop.f32.mrf.mxu0
  %v2011 = vpop.f32.mrf.mxu0
  %v2012 = vadd.f32 0.0, %v2011
  %v2013 = vpop.f32.mrf.mxu0
  %2014 = vmatprep.mubr.bf16.mxu0 0
  %2015 = vmatmul.mubr.bf16.gmra.mxu0 %v1851
  %v2016 = vpop.f32.mrf.mxu0
  %v2017 = vadd.f32 0.0, %v2016
  %v2018 = vpop.f32.mrf.mxu0
  %v2019 = vpop.f32.mrf.mxu0
  %v2020 = vadd.f32 0.0, %v2019
  %v2021 = vpop.f32.mrf.mxu0
  %2022 = vmatprep.mubr.bf16.mxu0 0
  %2023 = vmatmul.mubr.bf16.gmra.mxu0 %v1854
  %v2024 = vpop.f32.mrf.mxu0
  %v2025 = vadd.f32 0.0, %v2024
  %v2026 = vpop.f32.mrf.mxu0
  %v2027 = vpop.f32.mrf.mxu0
  %v2028 = vadd.f32 0.0, %v2027
  %v2029 = vpop.f32.mrf.mxu0
  %2030 = vmatprep.mubr.bf16.mxu0 0
  %2031 = vmatmul.mubr.bf16.gmra.mxu0 %v1857
  %v2032 = vpop.f32.mrf.mxu0
  %v2033 = vadd.f32 0.0, %v2032
  %v2034 = vpop.f32.mrf.mxu0
  %v2035 = vpop.f32.mrf.mxu0
  %v2036 = vadd.f32 0.0, %v2035
  %v2037 = vpop.f32.mrf.mxu0
  %2038 = vmatprep.mubr.bf16.mxu0 0
  %2039 = vmatmul.mubr.bf16.gmra.mxu0 %v1860
  %v2040 = vpop.f32.mrf.mxu0
  %v2041 = vadd.f32 0.0, %v2040
  %v2042 = vpop.f32.mrf.mxu0
  %v2043 = vpop.f32.mrf.mxu0
  %v2044 = vadd.f32 0.0, %v2043
  %v2045 = vpop.f32.mrf.mxu0
  %2046 = vdwg.mxu0
  %v2047 = vxor.u32 %v1897, 2147483648
  %v2048 = vxor.u32 %v1900, 2147483648
  %v2049 = vxor.u32 %v1905, 2147483648
  %v2050 = vxor.u32 %v1908, 2147483648
  %v2051 = vxor.u32 %v1913, 2147483648
  %v2052 = vxor.u32 %v1916, 2147483648
  %v2053 = vxor.u32 %v1921, 2147483648
  %v2054 = vxor.u32 %v1924, 2147483648
  %v2055 = vxor.u32 %v1929, 2147483648
  %v2056 = vxor.u32 %v1932, 2147483648
  %v2057 = vxor.u32 %v1937, 2147483648
  %v2058 = vxor.u32 %v1940, 2147483648
  %v2059 = vxor.u32 %v1945, 2147483648
  %v2060 = vxor.u32 %v1948, 2147483648
  %v2061 = vxor.u32 %v1953, 2147483648
  %v2062 = vxor.u32 %v1956, 2147483648
  %v2063 = vxor.u32 %v1961, 2147483648
  %v2064 = vxor.u32 %v1964, 2147483648
  %v2065 = vxor.u32 %v1969, 2147483648
  %v2066 = vxor.u32 %v1972, 2147483648
  %v2067 = vxor.u32 %v1977, 2147483648
  %v2068 = vxor.u32 %v1980, 2147483648
  %v2069 = vxor.u32 %v1985, 2147483648
  %v2070 = vxor.u32 %v1988, 2147483648
  %v2071 = vxor.u32 %v1993, 2147483648
  %v2072 = vxor.u32 %v1996, 2147483648
  %v2073 = vxor.u32 %v2001, 2147483648
  %v2074 = vxor.u32 %v2004, 2147483648
  %v2075 = vxor.u32 %v2009, 2147483648
  %v2076 = vxor.u32 %v2012, 2147483648
  %v2077 = vxor.u32 %v2017, 2147483648
  %v2078 = vxor.u32 %v2020, 2147483648
  %v2079 = vxor.u32 %v2025, 2147483648
  %v2080 = vxor.u32 %v2028, 2147483648
  %v2081 = vxor.u32 %v2033, 2147483648
  %v2082 = vxor.u32 %v2036, 2147483648
  %v2083 = vxor.u32 %v2041, 2147483648
  %v2084 = vxor.u32 %v2044, 2147483648
  %v2085 = vmul.f32 %v2047, 1.442695
  %v2086 = vpow.pop %v2085
  %v2087 = vmul.f32 %v2048, 1.442695
  %v2088 = vpow.pop %v2087
  %v2089 = vmul.f32 %v2049, 1.442695
  %v2090 = vpow.pop %v2089
  %v2091 = vmul.f32 %v2050, 1.442695
  %v2092 = vpow.pop %v2091
  %v2093 = vmul.f32 %v2051, 1.442695
  %v2094 = vpow.pop %v2093
  %v2095 = vmul.f32 %v2052, 1.442695
  %v2096 = vpow.pop %v2095
  %v2097 = vmul.f32 %v2053, 1.442695
  %v2098 = vpow.pop %v2097
  %v2099 = vmul.f32 %v2054, 1.442695
  %v2100 = vpow.pop %v2099
  %v2101 = vmul.f32 %v2055, 1.442695
  %v2102 = vpow.pop %v2101
  %v2103 = vmul.f32 %v2056, 1.442695
  %v2104 = vpow.pop %v2103
  %v2105 = vmul.f32 %v2057, 1.442695
  %v2106 = vpow.pop %v2105
  %v2107 = vmul.f32 %v2058, 1.442695
  %v2108 = vpow.pop %v2107
  %v2109 = vmul.f32 %v2059, 1.442695
  %v2110 = vpow.pop %v2109
  %v2111 = vmul.f32 %v2060, 1.442695
  %v2112 = vpow.pop %v2111
  %v2113 = vmul.f32 %v2061, 1.442695
  %v2114 = vpow.pop %v2113
  %v2115 = vmul.f32 %v2062, 1.442695
  %v2116 = vpow.pop %v2115
  %v2117 = vmul.f32 %v2063, 1.442695
  %v2118 = vpow.pop %v2117
  %v2119 = vmul.f32 %v2064, 1.442695
  %v2120 = vpow.pop %v2119
  %v2121 = vmul.f32 %v2065, 1.442695
  %v2122 = vpow.pop %v2121
  %v2123 = vmul.f32 %v2066, 1.442695
  %v2124 = vpow.pop %v2123
  %v2125 = vmul.f32 %v2067, 1.442695
  %v2126 = vpow.pop %v2125
  %v2127 = vmul.f32 %v2068, 1.442695
  %v2128 = vpow.pop %v2127
  %v2129 = vmul.f32 %v2069, 1.442695
  %v2130 = vpow.pop %v2129
  %v2131 = vmul.f32 %v2070, 1.442695
  %v2132 = vpow.pop %v2131
  %v2133 = vmul.f32 %v2071, 1.442695
  %v2134 = vpow.pop %v2133
  %v2135 = vmul.f32 %v2072, 1.442695
  %v2136 = vpow.pop %v2135
  %v2137 = vmul.f32 %v2073, 1.442695
  %v2138 = vpow.pop %v2137
  %v2139 = vmul.f32 %v2074, 1.442695
  %v2140 = vpow.pop %v2139
  %v2141 = vmul.f32 %v2075, 1.442695
  %v2142 = vpow.pop %v2141
  %v2143 = vmul.f32 %v2076, 1.442695
  %v2144 = vpow.pop %v2143
  %v2145 = vmul.f32 %v2077, 1.442695
  %v2146 = vpow.pop %v2145
  %v2147 = vmul.f32 %v2078, 1.442695
  %v2148 = vpow.pop %v2147
  %v2149 = vmul.f32 %v2079, 1.442695
  %v2150 = vpow.pop %v2149
  %v2151 = vmul.f32 %v2080, 1.442695
  %v2152 = vpow.pop %v2151
  %v2153 = vmul.f32 %v2081, 1.442695
  %v2154 = vpow.pop %v2153
  %v2155 = vmul.f32 %v2082, 1.442695
  %v2156 = vpow.pop %v2155
  %v2157 = vmul.f32 %v2083, 1.442695
  %v2158 = vpow.pop %v2157
  %v2159 = vmul.f32 %v2084, 1.442695
  %v2160 = vpow.pop %v2159
  %v2161 = vadd.f32 %v2086, 1.0
  %v2162 = vadd.f32 %v2088, 1.0
  %v2163 = vadd.f32 %v2090, 1.0
  %v2164 = vadd.f32 %v2092, 1.0
  %v2165 = vadd.f32 %v2094, 1.0
  %v2166 = vadd.f32 %v2096, 1.0
  %v2167 = vadd.f32 %v2098, 1.0
  %v2168 = vadd.f32 %v2100, 1.0
  %v2169 = vadd.f32 %v2102, 1.0
  %v2170 = vadd.f32 %v2104, 1.0
  %v2171 = vadd.f32 %v2106, 1.0
  %v2172 = vadd.f32 %v2108, 1.0
  %v2173 = vadd.f32 %v2110, 1.0
  %v2174 = vadd.f32 %v2112, 1.0
  %v2175 = vadd.f32 %v2114, 1.0
  %v2176 = vadd.f32 %v2116, 1.0
  %v2177 = vadd.f32 %v2118, 1.0
  %v2178 = vadd.f32 %v2120, 1.0
  %v2179 = vadd.f32 %v2122, 1.0
  %v2180 = vadd.f32 %v2124, 1.0
  %v2181 = vadd.f32 %v2126, 1.0
  %v2182 = vadd.f32 %v2128, 1.0
  %v2183 = vadd.f32 %v2130, 1.0
  %v2184 = vadd.f32 %v2132, 1.0
  %v2185 = vadd.f32 %v2134, 1.0
  %v2186 = vadd.f32 %v2136, 1.0
  %v2187 = vadd.f32 %v2138, 1.0
  %v2188 = vadd.f32 %v2140, 1.0
  %v2189 = vadd.f32 %v2142, 1.0
  %v2190 = vadd.f32 %v2144, 1.0
  %v2191 = vadd.f32 %v2146, 1.0
  %v2192 = vadd.f32 %v2148, 1.0
  %v2193 = vadd.f32 %v2150, 1.0
  %v2194 = vadd.f32 %v2152, 1.0
  %v2195 = vadd.f32 %v2154, 1.0
  %v2196 = vadd.f32 %v2156, 1.0
  %v2197 = vadd.f32 %v2158, 1.0
  %v2198 = vadd.f32 %v2160, 1.0
  %v2199 = vrcp.pop %v2161
  %v2200 = vmul.f32 1.0, %v2199
  %v2201 = vrcp.pop %v2162
  %v2202 = vmul.f32 1.0, %v2201
  %v2203 = vrcp.pop %v2163
  %v2204 = vmul.f32 1.0, %v2203
  %v2205 = vrcp.pop %v2164
  %v2206 = vmul.f32 1.0, %v2205
  %v2207 = vrcp.pop %v2165
  %v2208 = vmul.f32 1.0, %v2207
  %v2209 = vrcp.pop %v2166
  %v2210 = vmul.f32 1.0, %v2209
  %v2211 = vrcp.pop %v2167
  %v2212 = vmul.f32 1.0, %v2211
  %v2213 = vrcp.pop %v2168
  %v2214 = vmul.f32 1.0, %v2213
  %v2215 = vrcp.pop %v2169
  %v2216 = vmul.f32 1.0, %v2215
  %v2217 = vrcp.pop %v2170
  %v2218 = vmul.f32 1.0, %v2217
  %v2219 = vrcp.pop %v2171
  %v2220 = vmul.f32 1.0, %v2219
  %v2221 = vrcp.pop %v2172
  %v2222 = vmul.f32 1.0, %v2221
  %v2223 = vrcp.pop %v2173
  %v2224 = vmul.f32 1.0, %v2223
  %v2225 = vrcp.pop %v2174
  %v2226 = vmul.f32 1.0, %v2225
  %v2227 = vrcp.pop %v2175
  %v2228 = vmul.f32 1.0, %v2227
  %v2229 = vrcp.pop %v2176
  %v2230 = vmul.f32 1.0, %v2229
  %v2231 = vrcp.pop %v2177
  %v2232 = vmul.f32 1.0, %v2231
  %v2233 = vrcp.pop %v2178
  %v2234 = vmul.f32 1.0, %v2233
  %v2235 = vrcp.pop %v2179
  %v2236 = vmul.f32 1.0, %v2235
  %v2237 = vrcp.pop %v2180
  %v2238 = vmul.f32 1.0, %v2237
  %v2239 = vrcp.pop %v2181
  %v2240 = vmul.f32 1.0, %v2239
  %v2241 = vrcp.pop %v2182
  %v2242 = vmul.f32 1.0, %v2241
  %v2243 = vrcp.pop %v2183
  %v2244 = vmul.f32 1.0, %v2243
  %v2245 = vrcp.pop %v2184
  %v2246 = vmul.f32 1.0, %v2245
  %v2247 = vrcp.pop %v2185
  %v2248 = vmul.f32 1.0, %v2247
  %v2249 = vrcp.pop %v2186
  %v2250 = vmul.f32 1.0, %v2249
  %v2251 = vrcp.pop %v2187
  %v2252 = vmul.f32 1.0, %v2251
  %v2253 = vrcp.pop %v2188
  %v2254 = vmul.f32 1.0, %v2253
  %v2255 = vrcp.pop %v2189
  %v2256 = vmul.f32 1.0, %v2255
  %v2257 = vrcp.pop %v2190
  %v2258 = vmul.f32 1.0, %v2257
  %v2259 = vrcp.pop %v2191
  %v2260 = vmul.f32 1.0, %v2259
  %v2261 = vrcp.pop %v2192
  %v2262 = vmul.f32 1.0, %v2261
  %v2263 = vrcp.pop %v2193
  %v2264 = vmul.f32 1.0, %v2263
  %v2265 = vrcp.pop %v2194
  %v2266 = vmul.f32 1.0, %v2265
  %v2267 = vrcp.pop %v2195
  %v2268 = vmul.f32 1.0, %v2267
  %v2269 = vrcp.pop %v2196
  %v2270 = vmul.f32 1.0, %v2269
  %v2271 = vrcp.pop %v2197
  %v2272 = vmul.f32 1.0, %v2271
  %v2273 = vrcp.pop %v2198
  %v2274 = vmul.f32 1.0, %v2273
  %vm2275 = vcmask 7168
  %2276 = vst.msk [vmem:[%s7] sm:$0xff] %vm2275, %v676
  %2277 = vst.msk [vmem:[%s7 + $0x8] sm:$0xff] %vm2275, %v678
  %2278 = vst.msk [vmem:[%s7 + $0x10] sm:$0xff] %vm2275, %v680
  %2279 = vst.msk [vmem:[%s7 + $0x18] sm:$0xff] %vm2275, %v682
  %2280 = vst.msk [vmem:[%s7 + $0x20] sm:$0xff] %vm2275, %v684
  %2281 = vst.msk [vmem:[%s7 + $0x28] sm:$0xff] %vm2275, %v686
  %2282 = vst.msk [vmem:[%s7 + $0x30] sm:$0xff] %vm2275, %v688
  %2283 = vst.msk [vmem:[%s7 + $0x38] sm:$0xff] %vm2275, %v690
  %2284 = vst.msk [vmem:[%s7 + $0x40] sm:$0xff] %vm2275, %v692
  %2285 = vst.msk [vmem:[%s7 + $0x48] sm:$0xff] %vm2275, %v694
  %2286 = vst.msk [vmem:[%s7 + $0x50] sm:$0xff] %vm2275, %v696
  %2287 = vst.msk [vmem:[%s7 + $0x58] sm:$0xff] %vm2275, %v698
  %2288 = vst.msk [vmem:[%s7 + $0x60] sm:$0xff] %vm2275, %v700
  %2289 = vst.msk [vmem:[%s7 + $0x68] sm:$0xff] %vm2275, %v702
  %2290 = vst.msk [vmem:[%s7 + $0x70] sm:$0xff] %vm2275, %v704
  %2291 = vst.msk [vmem:[%s7 + $0x78] sm:$0xff] %vm2275, %v706
  %2292 = vst.msk [vmem:[%s7 + $0x80] sm:$0xff] %vm2275, %v708
  %2293 = vst.msk [vmem:[%s7 + $0x88] sm:$0xff] %vm2275, %v710
  %2294 = vst.msk [vmem:[%s7 + $0x90] sm:$0xff] %vm2275, %v712
  %2295 = vst.msk [vmem:[%s7 + $0x98] sm:$0xff] %vm2275, %v714
  %2296 = vst.msk [vmem:[%s7 + $0xa0] sm:$0xff] %vm2275, %v716
  %2297 = vst.msk [vmem:[%s7 + $0xa8] sm:$0xff] %vm2275, %v718
  %2298 = vst.msk [vmem:[%s7 + $0xb0] sm:$0xff] %vm2275, %v720
  %2299 = vst.msk [vmem:[%s7 + $0xb8] sm:$0xff] %vm2275, %v722
  %2300 = vst.msk [vmem:[%s7 + $0xc0] sm:$0xff] %vm2275, %v724
  %2301 = vst.msk [vmem:[%s7 + $0xc8] sm:$0xff] %vm2275, %v726
  %2302 = vst.msk [vmem:[%s7 + $0xd0] sm:$0xff] %vm2275, %v728
  %2303 = vst.msk [vmem:[%s7 + $0xd8] sm:$0xff] %vm2275, %v730
  %2304 = vst.msk [vmem:[%s7 + $0xe0] sm:$0xff] %vm2275, %v732
  %2305 = vst.msk [vmem:[%s7 + $0xe8] sm:$0xff] %vm2275, %v734
  %2306 = vst.msk [vmem:[%s7 + $0xf0] sm:$0xff] %vm2275, %v736
  %2307 = vst.msk [vmem:[%s7 + $0xf8] sm:$0xff] %vm2275, %v738
  %2308 = vst.msk [vmem:[%s7 + $0x100] sm:$0xff] %vm2275, %v740
  %2309 = vst.msk [vmem:[%s7 + $0x108] sm:$0xff] %vm2275, %v742
  %2310 = vst.msk [vmem:[%s7 + $0x110] sm:$0xff] %vm2275, %v744
  %2311 = vst.msk [vmem:[%s7 + $0x118] sm:$0xff] %vm2275, %v746
  %2312 = vst.msk [vmem:[%s7 + $0x120] sm:$0xff] %vm2275, %v748
  %2313 = vst.msk [vmem:[%s7 + $0x128] sm:$0xff] %vm2275, %v750
  %2352 = vrot.lane.b32.xlu0 %v2200, 1
  %v2353 = vpop.permute.xlu0 %2352
  %2354 = vrot.lane.b32.xlu0 %v2202, 1
  %v2355 = vpop.permute.xlu0 %2354
  %2356 = vrot.lane.b32.xlu0 %v2204, 1
  %v2357 = vpop.permute.xlu0 %2356
  %2358 = vrot.lane.b32.xlu0 %v2206, 1
  %v2359 = vpop.permute.xlu0 %2358
  %2360 = vrot.lane.b32.xlu0 %v2208, 1
  %v2361 = vpop.permute.xlu0 %2360
  %2362 = vrot.lane.b32.xlu0 %v2210, 1
  %v2363 = vpop.permute.xlu0 %2362
  %2364 = vrot.lane.b32.xlu0 %v2212, 1
  %v2365 = vpop.permute.xlu0 %2364
  %2366 = vrot.lane.b32.xlu0 %v2214, 1
  %v2367 = vpop.permute.xlu0 %2366
  %2368 = vrot.lane.b32.xlu0 %v2216, 1
  %v2369 = vpop.permute.xlu0 %2368
  %2370 = vrot.lane.b32.xlu0 %v2218, 1
  %v2371 = vpop.permute.xlu0 %2370
  %2372 = vrot.lane.b32.xlu0 %v2220, 1
  %v2373 = vpop.permute.xlu0 %2372
  %2374 = vrot.lane.b32.xlu0 %v2222, 1
  %v2375 = vpop.permute.xlu0 %2374
  %2376 = vrot.lane.b32.xlu0 %v2224, 1
  %v2377 = vpop.permute.xlu0 %2376
  %2378 = vrot.lane.b32.xlu0 %v2226, 1
  %v2379 = vpop.permute.xlu0 %2378
  %2380 = vrot.lane.b32.xlu0 %v2228, 1
  %v2381 = vpop.permute.xlu0 %2380
  %2382 = vrot.lane.b32.xlu0 %v2230, 1
  %v2383 = vpop.permute.xlu0 %2382
  %2384 = vrot.lane.b32.xlu0 %v2232, 1
  %v2385 = vpop.permute.xlu0 %2384
  %2386 = vrot.lane.b32.xlu0 %v2234, 1
  %v2387 = vpop.permute.xlu0 %2386
  %2388 = vrot.lane.b32.xlu0 %v2236, 1
  %v2389 = vpop.permute.xlu0 %2388
  %2390 = vrot.lane.b32.xlu0 %v2238, 1
  %v2391 = vpop.permute.xlu0 %2390
  %2392 = vrot.lane.b32.xlu0 %v2240, 1
  %v2393 = vpop.permute.xlu0 %2392
  %2394 = vrot.lane.b32.xlu0 %v2242, 1
  %v2395 = vpop.permute.xlu0 %2394
  %2396 = vrot.lane.b32.xlu0 %v2244, 1
  %v2397 = vpop.permute.xlu0 %2396
  %2398 = vrot.lane.b32.xlu0 %v2246, 1
  %v2399 = vpop.permute.xlu0 %2398
  %2400 = vrot.lane.b32.xlu0 %v2248, 1
  %v2401 = vpop.permute.xlu0 %2400
  %2402 = vrot.lane.b32.xlu0 %v2250, 1
  %v2403 = vpop.permute.xlu0 %2402
  %2404 = vrot.lane.b32.xlu0 %v2252, 1
  %v2405 = vpop.permute.xlu0 %2404
  %2406 = vrot.lane.b32.xlu0 %v2254, 1
  %v2407 = vpop.permute.xlu0 %2406
  %2408 = vrot.lane.b32.xlu0 %v2256, 1
  %v2409 = vpop.permute.xlu0 %2408
  %2410 = vrot.lane.b32.xlu0 %v2258, 1
  %v2411 = vpop.permute.xlu0 %2410
  %2412 = vrot.lane.b32.xlu0 %v2260, 1
  %v2413 = vpop.permute.xlu0 %2412
  %2414 = vrot.lane.b32.xlu0 %v2262, 1
  %v2415 = vpop.permute.xlu0 %2414
  %2416 = vrot.lane.b32.xlu0 %v2264, 1
  %v2417 = vpop.permute.xlu0 %2416
  %2418 = vrot.lane.b32.xlu0 %v2266, 1
  %v2419 = vpop.permute.xlu0 %2418
  %2420 = vrot.lane.b32.xlu0 %v2268, 1
  %v2421 = vpop.permute.xlu0 %2420
  %2422 = vrot.lane.b32.xlu0 %v2270, 1
  %v2423 = vpop.permute.xlu0 %2422
  %2424 = vrot.lane.b32.xlu0 %v2272, 1
  %v2425 = vpop.permute.xlu0 %2424
  %2426 = vrot.lane.b32.xlu0 %v2274, 1
  %v2427 = vpop.permute.xlu0 %2426
  %vm2466 = vcmask 31752
  %2467 = vst.msk [vmem:[%s7] sm:$0xff] %vm2466, %v2353
  %2468 = vst.msk [vmem:[%s7 + $0x8] sm:$0xff] %vm2466, %v2355
  %2469 = vst.msk [vmem:[%s7 + $0x10] sm:$0xff] %vm2466, %v2357
  %2470 = vst.msk [vmem:[%s7 + $0x18] sm:$0xff] %vm2466, %v2359
  %2471 = vst.msk [vmem:[%s7 + $0x20] sm:$0xff] %vm2466, %v2361
  %2472 = vst.msk [vmem:[%s7 + $0x28] sm:$0xff] %vm2466, %v2363
  %2473 = vst.msk [vmem:[%s7 + $0x30] sm:$0xff] %vm2466, %v2365
  %2474 = vst.msk [vmem:[%s7 + $0x38] sm:$0xff] %vm2466, %v2367
  %2475 = vst.msk [vmem:[%s7 + $0x40] sm:$0xff] %vm2466, %v2369
  %2476 = vst.msk [vmem:[%s7 + $0x48] sm:$0xff] %vm2466, %v2371
  %2477 = vst.msk [vmem:[%s7 + $0x50] sm:$0xff] %vm2466, %v2373
  %2478 = vst.msk [vmem:[%s7 + $0x58] sm:$0xff] %vm2466, %v2375
  %2479 = vst.msk [vmem:[%s7 + $0x60] sm:$0xff] %vm2466, %v2377
  %2480 = vst.msk [vmem:[%s7 + $0x68] sm:$0xff] %vm2466, %v2379
  %2481 = vst.msk [vmem:[%s7 + $0x70] sm:$0xff] %vm2466, %v2381
  %2482 = vst.msk [vmem:[%s7 + $0x78] sm:$0xff] %vm2466, %v2383
  %2483 = vst.msk [vmem:[%s7 + $0x80] sm:$0xff] %vm2466, %v2385
  %2484 = vst.msk [vmem:[%s7 + $0x88] sm:$0xff] %vm2466, %v2387
  %2485 = vst.msk [vmem:[%s7 + $0x90] sm:$0xff] %vm2466, %v2389
  %2486 = vst.msk [vmem:[%s7 + $0x98] sm:$0xff] %vm2466, %v2391
  %2487 = vst.msk [vmem:[%s7 + $0xa0] sm:$0xff] %vm2466, %v2393
  %2488 = vst.msk [vmem:[%s7 + $0xa8] sm:$0xff] %vm2466, %v2395
  %2489 = vst.msk [vmem:[%s7 + $0xb0] sm:$0xff] %vm2466, %v2397
  %2490 = vst.msk [vmem:[%s7 + $0xb8] sm:$0xff] %vm2466, %v2399
  %2491 = vst.msk [vmem:[%s7 + $0xc0] sm:$0xff] %vm2466, %v2401
  %2492 = vst.msk [vmem:[%s7 + $0xc8] sm:$0xff] %vm2466, %v2403
  %2493 = vst.msk [vmem:[%s7 + $0xd0] sm:$0xff] %vm2466, %v2405
  %2494 = vst.msk [vmem:[%s7 + $0xd8] sm:$0xff] %vm2466, %v2407
  %2495 = vst.msk [vmem:[%s7 + $0xe0] sm:$0xff] %vm2466, %v2409
  %2496 = vst.msk [vmem:[%s7 + $0xe8] sm:$0xff] %vm2466, %v2411
  %2497 = vst.msk [vmem:[%s7 + $0xf0] sm:$0xff] %vm2466, %v2413
  %2498 = vst.msk [vmem:[%s7 + $0xf8] sm:$0xff] %vm2466, %v2415
  %2499 = vst.msk [vmem:[%s7 + $0x100] sm:$0xff] %vm2466, %v2417
  %2500 = vst.msk [vmem:[%s7 + $0x108] sm:$0xff] %vm2466, %v2419
  %2501 = vst.msk [vmem:[%s7 + $0x110] sm:$0xff] %vm2466, %v2421
  %2502 = vst.msk [vmem:[%s7 + $0x118] sm:$0xff] %vm2466, %v2423
  %2503 = vst.msk [vmem:[%s7 + $0x120] sm:$0xff] %vm2466, %v2425
  %2504 = vst.msk [vmem:[%s7 + $0x128] sm:$0xff] %vm2466, %v2427
  // Predicated region
  $region30: #{tpu_custom_call.1} parent=0 // pred_check
    _
  $region31: #{tpu_custom_call.1} parent=0 // pred_check_branch
    %2506 = sbr.rel (0) target = $region33
  $region32: #{tpu_custom_call.1} parent=0 // pred_region
    _
  $region33: #{tpu_custom_call.1} parent=0 // pred_fallthru
    _
  // Predicated region
  $region34: #{tpu_custom_call.1} parent=0 // pred_check
    _
  $region35: #{tpu_custom_call.1} parent=0 // pred_check_branch
    %2508 = sbr.rel (0) target = $region37
  $region36: #{tpu_custom_call.1} parent=0 // pred_region
    _
  $region37: #{tpu_custom_call.1} parent=0 // pred_fallthru
    _

</llo_original>
